<compile_context>
chip_gen: v7x
topology: tpu7x:2x2x1
jax: 0.10.0
libtpu: 0.0.40
codegen_flags: <defaults>
</compile_context>

<pallas_src>
import functools
import math

import jax
import jax.numpy as jnp
from jax import lax
from jax.experimental import pallas as pl
from jax.experimental.pallas import tpu as pltpu

# ---------------- small config consistent with the module ----------------
B = 2
IMG_C, IMG_H, IMG_W = 3, 32, 32
D_MODEL = 64          # module: 256
N_HEADS = 4           # module: 8
DIM_FF = 128          # module: 1024
NUM_ENC_LAYERS = 2
NUM_DEC_LAYERS = 4
NUM_QUERIES = 8       # module: tgt_shape (20, 1)
NUM_CLASSES = 21
BRANCH_CH = 64        # module: branch_channels 256
HEAD_W = NUM_CLASSES + BRANCH_CH + 1   # fused cls + controller head width
LN_EPS = 1e-5
BN_EPS = 1e-5

# padded lane width of the packed bias / LayerNorm vector blobs
VEC_W = max(2 * D_MODEL, DIM_FF, HEAD_W, BRANCH_CH)

# layout (row order, width) of the packed vector blobs
ENC_VEC_LAYOUT = [("qk_b", 2 * D_MODEL), ("v_b", D_MODEL), ("o_b", D_MODEL),
                  ("ln1_g", D_MODEL), ("ln1_b", D_MODEL), ("ff1_b", DIM_FF),
                  ("ff2_b", D_MODEL), ("ln2_g", D_MODEL), ("ln2_b", D_MODEL)]
DEC_VEC_LAYOUT = [("sa_qk_b", 2 * D_MODEL), ("sa_v_b", D_MODEL),
                  ("sa_o_b", D_MODEL), ("ln1_g", D_MODEL), ("ln1_b", D_MODEL),
                  ("ca_q_b", D_MODEL), ("ca_k_b", D_MODEL), ("ca_v_b", D_MODEL),
                  ("ca_o_b", D_MODEL), ("ln2_g", D_MODEL), ("ln2_b", D_MODEL),
                  ("ff1_b", DIM_FF), ("ff2_b", D_MODEL), ("ln3_g", D_MODEL),
                  ("ln3_b", D_MODEL)]
MISC_VEC_LAYOUT = [("dec_norm_g", D_MODEL), ("dec_norm_b", D_MODEL),
                   ("branch_b", BRANCH_CH), ("head_b", HEAD_W)]

PACKED_ORDER = ["enc_qk_w", "enc_dd_w", "enc_ff1_w", "enc_ff2_w", "enc_vec",
                "dec_qk_w", "dec_dd_w", "dec_ff1_w", "dec_ff2_w", "dec_vec",
                "misc_vec", "branch_w", "head_w"]


def _vec_index(layout):
    return {name: (i, w) for i, (name, w) in enumerate(layout)}


# ======================= chip-generation aware helpers =====================

def _device_kind():
    try:
        return jax.devices()[0].device_kind.lower()
    except Exception:
        return ""


@functools.lru_cache(maxsize=None)
def _num_parallel_cores():
    # v7x has 2 TensorCores per chip; v5e/v6e have 1 -> grid splitting there
    # is a sequential loop with pure overhead.
    return 2 if "v7" in _device_kind() else 1


@functools.lru_cache(maxsize=None)
def _vmem_limit_bytes():
    kind = _device_kind()
    if "v7" in kind:
        return 48 * 1024 * 1024          # physical VMEM is 64 MiB / TC
    if "v5" in kind or "v6" in kind:
        return 64 * 1024 * 1024
    return None


_single_buf_ok = None


def _supports_single_buffering():
    """Probe (once) whether pipeline_mode=pl.Buffered(1) is supported."""
    global _single_buf_ok
    if _single_buf_ok is None:
        def _probe(x_ref, w_ref, o_ref):
            o_ref[...] = x_ref[...] + w_ref[...]
        try:
            out = pl.pallas_call(
                _probe,
                out_shape=jax.ShapeDtypeStruct((16, 128), jnp.float32),
                grid=(2,),
                in_specs=[
                    pl.BlockSpec((8, 128), lambda i: (i, 0)),
                    pl.BlockSpec((8, 128), lambda i: (0, 0),
                                 pipeline_mode=pl.Buffered(1)),
                ],
                out_specs=pl.BlockSpec((8, 128), lambda i: (i, 0)),
            )(jnp.zeros((16, 128), jnp.float32),
              jnp.ones((8, 128), jnp.float32))
            jax.block_until_ready(out)
            _single_buf_ok = True
        except Exception:
            _single_buf_ok = False
    return _single_buf_ok


def _const_spec(arr):
    """Grid-invariant (weight) input: constant index_map, single-buffered."""
    zeros = (0,) * arr.ndim
    if _supports_single_buffering():
        return pl.BlockSpec(arr.shape, lambda g: zeros,
                            pipeline_mode=pl.Buffered(1))
    return pl.BlockSpec(arr.shape, lambda g: zeros)


# ====================== backbone conv (im2col + matmul) ====================

def _conv_kernel(cols_ref, w_ref, s_ref, t_ref, o_ref, *, act):
    acc = jnp.dot(cols_ref[...], w_ref[...], preferred_element_type=jnp.float32)
    acc = acc * s_ref[...] + t_ref[...]
    if act == "relu":
        acc = jnp.maximum(acc, 0.0)
    o_ref[...] = acc


def _conv_res_kernel(cols_ref, w_ref, s_ref, t_ref, r_ref, o_ref):
    acc = jnp.dot(cols_ref[...], w_ref[...], preferred_element_type=jnp.float32)
    acc = acc * s_ref[...] + t_ref[...] + r_ref[...]
    o_ref[...] = jnp.maximum(acc, 0.0)          # fused residual add + ReLU


def pallas_conv_mm(cols, w, scale, shift, act="relu", residual=None):
    """(M,K) @ (K,N) in bf16 with f32 BN scale/shift (+ optional residual)."""
    cols = cols.astype(jnp.bfloat16)
    w = w.astype(jnp.bfloat16)
    M, K = cols.shape
    N = w.shape[1]
    # Split rows only when there are 2 TensorCores (v7x); elsewhere the grid
    # is a sequential loop and splitting only adds per-step overhead.
    ntiles = 2 if (_num_parallel_cores() == 2 and M % 16 == 0) else 1
    tm = M // ntiles
    scale = scale.reshape(1, N).astype(jnp.float32)
    shift = shift.reshape(1, N).astype(jnp.float32)

    in_specs = [pl.BlockSpec((tm, K), lambda i: (i, 0)),
                _const_spec(w), _const_spec(scale), _const_spec(shift)]
    args = [cols, w, scale, shift]
    bytes_accessed = cols.size * 2 + w.size * 2 + M * N * 4 + 2 * N * 4
    if residual is None:
        kern = functools.partial(_conv_kernel, act=act)
    else:
        in_specs.append(pl.BlockSpec((tm, N), lambda i: (i, 0)))
        args.append(residual.astype(jnp.float32))
        bytes_accessed += M * N * 4
        kern = _conv_res_kernel

    return pl.pallas_call(
        kern,
        out_shape=jax.ShapeDtypeStruct((M, N), jnp.float32),
        grid=(ntiles,),
        in_specs=in_specs,
        out_specs=pl.BlockSpec((tm, N), lambda i: (i, 0)),
        compiler_params=pltpu.CompilerParams(
            dimension_semantics=("parallel",),
            vmem_limit_bytes=_vmem_limit_bytes()),
        cost_estimate=pl.CostEstimate(flops=int(2 * M * K * N),
                                      transcendentals=0,
                                      bytes_accessed=int(bytes_accessed)),
    )(*args)


def im2col(x, kh, kw, stride, pad):
    # TODO(synk): at production feature-map sizes move im2col into the conv
    # kernel (build the 9 shifted views from a VMEM-resident input block) to
    # kill the 9x HBM read amplification; here the bf16 cols keep it cheap.
    x = jnp.pad(x, ((0, 0), (pad, pad), (pad, pad), (0, 0)))
    Hp, Wp = x.shape[1], x.shape[2]
    Ho = (Hp - kh) // stride + 1
    Wo = (Wp - kw) // stride + 1
    cols = []
    for i in range(kh):
        for j in range(kw):
            cols.append(x[:, i::stride, j::stride, :][:, :Ho, :Wo, :])
    return jnp.concatenate(cols, axis=-1), Ho, Wo


def conv_bn(x, p, stride, act="relu", residual=None):
    """3x3 conv + folded BatchNorm (+ReLU / +residual+ReLU)."""
    w = p["w"]
    kh, kw, cin, cout = w.shape
    cols, Ho, Wo = im2col(x.astype(jnp.bfloat16), kh, kw, stride, kh // 2)
    bsz = x.shape[0]
    scale = p["gamma"] / jnp.sqrt(p["var"] + BN_EPS)
    shift = p["beta"] - p["mean"] * scale
    res2d = None if residual is None else residual.reshape(bsz * Ho * Wo, cout)
    out = pallas_conv_mm(cols.reshape(bsz * Ho * Wo, kh * kw * cin),
                         w.reshape(kh * kw * cin, cout),
                         scale, shift, act=act, residual=res2d)
    return out.reshape(bsz, Ho, Wo, cout)


def img_backbone(x, p):
    """ResNet34-style (reduced depth) backbone: (B,H,W,3) -> (B,H/8,W/8,D)."""
    f = conv_bn(x, p["stem"], stride=2)                 # (B,16,16,16)
    f = conv_bn(f, p["down1"], stride=2)                # (B, 8, 8,32)
    r = conv_bn(f, p["res_a"], stride=1)
    f = conv_bn(r, p["res_b"], stride=1, residual=f)    # conv+BN+add+ReLU fused
    f = conv_bn(f, p["down2"], stride=2)                # (B, 4, 4, D_MODEL)
    return f


# ============ fused transformer + CondLSTR2D head (one pallas_call) ========

def make_transformer_detector_kernel(nb, L, Q):
    D = D_MODEL
    H = N_HEADS
    Dh = D // H
    att_scale = 1.0 / math.sqrt(Dh)
    ENC_IDX = _vec_index(ENC_VEC_LAYOUT)
    DEC_IDX = _vec_index(DEC_VEC_LAYOUT)
    MISC_IDX = _vec_index(MISC_VEC_LAYOUT)
    # order of the (D,D) weights inside the stacked "dd" blobs
    E_V, E_O = 0, 1
    D_SAV, D_SAO, D_CAQ, D_CAK, D_CAV, D_CAO = 0, 1, 2, 3, 4, 5

    def kernel(src_ref, pos_ref, kbias_ref, qpos_ref,
               enc_qk_w, enc_dd_w, enc_ff1_w, enc_ff2_w, enc_vec,
               dec_qk_w, dec_dd_w, dec_ff1_w, dec_ff2_w, dec_vec,
               misc_vec, branch_w, head_w,
               logits_ref, masks_ref):

        def vrow(blob, name, idx):
            r, w = idx[name]
            return blob[r:r + 1, :w]

        def mm(a, w, b=None, act=None):
            out = jnp.dot(a.astype(jnp.bfloat16), w,
                          preferred_element_type=jnp.float32)
            if b is not None:
                out = out + b
            if act == "relu":
                out = jnp.maximum(out, 0.0)
            return out

        def ln(x, g, b):
            mu = jnp.mean(x, axis=-1, keepdims=True)
            var = jnp.mean(jnp.square(x - mu), axis=-1, keepdims=True)
            return (x - mu) * lax.rsqrt(var + LN_EPS) * g + b

        def mha(q, k, v, o_w, o_b, lq, lk, use_kbias):
            """MHA with the output projection folded into the per-head loop
            (no lane concat, no separate (.,D)x(D,D) projection matmul)."""
            outs = []
            for bi in range(nb):
                qb = q[bi * lq:(bi + 1) * lq].astype(jnp.bfloat16)
                kb = k[bi * lk:(bi + 1) * lk].astype(jnp.bfloat16)
                vb = v[bi * lk:(bi + 1) * lk].astype(jnp.bfloat16)
                bias = kbias_ref[bi] if use_kbias else None   # (1, lk)
                acc = None
                for h in range(H):
                    sl = slice(h * Dh, (h + 1) * Dh)
                    s = lax.dot_general(qb[:, sl], kb[:, sl],
                                        (((1,), (1,)), ((), ())),
                                        preferred_element_type=jnp.float32)
                    s = s * att_scale
                    if bias is not None:
                        s = s + bias
                    s = s - jnp.max(s, axis=-1, keepdims=True)
                    e = jnp.exp(s)
                    p = e * pl.reciprocal(jnp.sum(e, axis=-1, keepdims=True),
                                          approx=False)
                    pv = jnp.dot(p.astype(jnp.bfloat16), vb[:, sl],
                                 preferred_element_type=jnp.float32)
                    part = jnp.dot(pv.astype(jnp.bfloat16), o_w[sl, :],
                                   preferred_element_type=jnp.float32)
                    acc = part if acc is None else acc + part
                outs.append(acc + o_b)
            return outs[0] if nb == 1 else jnp.concatenate(outs, axis=0)

        x = src_ref[...].reshape(nb * L, D)         # residual stream, f32
        pos = pos_ref[...].reshape(nb * L, D)
        qpos = qpos_ref[...].reshape(nb * Q, D)
        mv = misc_vec[...]

        # -------- encoder (unrolled; post-norm DETR layer) --------
        for l in range(NUM_ENC_LAYERS):
            ev = enc_vec[l]                          # (9, VEC_W) f32
            ew = enc_dd_w[l]                         # (2, D, D) bf16
            sp = x + pos
            qk = mm(sp, enc_qk_w[l], vrow(ev, "qk_b", ENC_IDX))   # fused Q|K
            v = mm(x, ew[E_V], vrow(ev, "v_b", ENC_IDX))
            a = mha(qk[:, :D], qk[:, D:], v,
                    ew[E_O], vrow(ev, "o_b", ENC_IDX), L, L, True)
            x = ln(x + a, vrow(ev, "ln1_g", ENC_IDX), vrow(ev, "ln1_b", ENC_IDX))
            hdn = mm(x, enc_ff1_w[l], vrow(ev, "ff1_b", ENC_IDX), act="relu")
            hdn = mm(hdn, enc_ff2_w[l], vrow(ev, "ff2_b", ENC_IDX))
            x = ln(x + hdn, vrow(ev, "ln2_g", ENC_IDX), vrow(ev, "ln2_b", ENC_IDX))

        memory = x                                   # (nb*L, D)
        mem_pos = memory + pos

        # -------- decoder (unrolled) --------
        # TODO(synk): at production size (D=256, FF=1024) switch these unrolled
        # layer loops to lax.fori_loop over the stacked layer axis to bound
        # vreg live ranges / spills.
        t = jnp.zeros((nb * Q, D), jnp.float32)
        for l in range(NUM_DEC_LAYERS):
            dv = dec_vec[l]                          # (15, VEC_W) f32
            dw = dec_dd_w[l]                         # (6, D, D) bf16
            tp = t + qpos
            qk = mm(tp, dec_qk_w[l], vrow(dv, "sa_qk_b", DEC_IDX))
            v = mm(t, dw[D_SAV], vrow(dv, "sa_v_b", DEC_IDX))
            a = mha(qk[:, :D], qk[:, D:], v,
                    dw[D_SAO], vrow(dv, "sa_o_b", DEC_IDX), Q, Q, False)
            t = ln(t + a, vrow(dv, "ln1_g", DEC_IDX), vrow(dv, "ln1_b", DEC_IDX))

            q = mm(t + qpos, dw[D_CAQ], vrow(dv, "ca_q_b", DEC_IDX))
            k = mm(mem_pos, dw[D_CAK], vrow(dv, "ca_k_b", DEC_IDX))
            v = mm(memory, dw[D_CAV], vrow(dv, "ca_v_b", DEC_IDX))
            a = mha(q, k, v, dw[D_CAO], vrow(dv, "ca_o_b", DEC_IDX), Q, L, True)
            t = ln(t + a, vrow(dv, "ln2_g", DEC_IDX), vrow(dv, "ln2_b", DEC_IDX))

            hdn = mm(t, dec_ff1_w[l], vrow(dv, "ff1_b", DEC_IDX), act="relu")
            hdn = mm(hdn, dec_ff2_w[l], vrow(dv, "ff2_b", DEC_IDX))
            t = ln(t + hdn, vrow(dv, "ln3_g", DEC_IDX), vrow(dv, "ln3_b", DEC_IDX))

        # return_intermediate_dec: only the last (normed) layer is consumed.
        hm = ln(t, vrow(mv, "dec_norm_g", MISC_IDX),
                vrow(mv, "dec_norm_b", MISC_IDX))             # (nb*Q, D)

        # -------- CondLSTR2D conditional head (fused, no HBM round trip) ----
        branch = mm(memory, branch_w[...], vrow(mv, "branch_b", MISC_IDX),
                    act="relu")                               # (nb*L, CCH)
        heads = mm(hm, head_w[...], vrow(mv, "head_b", MISC_IDX))  # (nb*Q, HEAD_W)
        for bi in range(nb):
            hb = heads[bi * Q:(bi + 1) * Q]
            logits_ref[bi] = hb[:, :NUM_CLASSES]
            gen_w = hb[:, NUM_CLASSES:NUM_CLASSES + BRANCH_CH]
            gen_b = hb[:, NUM_CLASSES + BRANCH_CH:]
            m = lax.dot_general(
                gen_w.astype(jnp.bfloat16),
                branch[bi * L:(bi + 1) * L].astype(jnp.bfloat16),
                (((1,), (1,)), ((), ())),
                preferred_element_type=jnp.float32) + gen_b
            masks_ref[bi] = 0.5 * (jnp.tanh(0.5 * m) + 1.0)   # stable sigmoid

    return kernel


def _transformer_cost(bsz, L, Q, weight_args):
    D, FF, H = D_MODEL, DIM_FF, N_HEADS
    enc = NUM_ENC_LAYERS * (2 * L * D * 2 * D + 2 * L * D * D + 4 * L * L * D +
                            2 * L * D * D + 2 * L * D * FF + 2 * L * FF * D)
    dec = NUM_DEC_LAYERS * (2 * Q * D * 2 * D + 2 * Q * D * D + 4 * Q * Q * D +
                            2 * Q * D * D + 2 * Q * D * D + 4 * L * D * D +
                            4 * Q * L * D + 2 * Q * D * D +
                            2 * Q * D * FF + 2 * Q * FF * D)
    det = 2 * L * D * BRANCH_CH + 2 * Q * D * HEAD_W + 2 * Q * BRANCH_CH * L
    flops = bsz * (enc + dec + det)
    trans = bsz * (NUM_ENC_LAYERS * H * L * L +
                   NUM_DEC_LAYERS * H * (Q * Q + Q * L) + Q * L)
    data_b = 4 * bsz * (2 * L * D_MODEL + L + Q * D_MODEL +
                        Q * NUM_CLASSES + Q * L)
    w_b = sum(int(a.size) * a.dtype.itemsize for a in weight_args)
    return int(flops), int(trans), int(data_b + w_b)


def run_transformer_detector(src, pos, key_bias, packed):
    """src/pos: (B, L, D); key_bias: (B, 1, L). Returns (logits, masks)."""
    bsz, L, D = src.shape
    Q = NUM_QUERIES
    # grid=(B,) only when 2 TensorCores can actually run it in parallel (v7x);
    # otherwise fold the whole batch into one kernel body (bigger matmul M).
    ngrid = 2 if (_num_parallel_cores() == 2 and bsz % 2 == 0) else 1
    nb = bsz // ngrid

    qpos = jnp.broadcast_to(packed["query_embed"][None], (bsz, Q, D))
    weight_args = [packed[k] for k in PACKED_ORDER]
    kernel = make_transformer_detector_kernel(nb, L, Q)

    def data_spec(shape):
        return pl.BlockSpec(shape, lambda g: (g, 0, 0))

    in_specs = [data_spec((nb, L, D)), data_spec((nb, L, D)),
                data_spec((nb, 1, L)), data_spec((nb, Q, D))]
    in_specs += [_const_spec(a) for a in weight_args]

    flops, trans, byts = _transformer_cost(bsz, L, Q, weight_args)

    logits, masks = pl.pallas_call(
        kernel,
        out_shape=(jax.ShapeDtypeStruct((bsz, Q, NUM_CLASSES), jnp.float32),
                   jax.ShapeDtypeStruct((bsz, Q, L), jnp.float32)),
        grid=(ngrid,),
        in_specs=in_specs,
        out_specs=(data_spec((nb, Q, NUM_CLASSES)), data_spec((nb, Q, L))),
        compiler_params=pltpu.CompilerParams(
            dimension_semantics=("parallel",),
            vmem_limit_bytes=_vmem_limit_bytes()),
        cost_estimate=pl.CostEstimate(flops=flops, transcendentals=trans,
                                      bytes_accessed=byts),
    )(src.astype(jnp.float32), pos.astype(jnp.float32),
      key_bias.astype(jnp.float32), qpos.astype(jnp.float32), *weight_args)
    return logits, masks


# ===================== wrapper-side parameter packing ======================

def _pack_vec_rows(layout, values):
    rows = []
    for name, w in layout:
        v = jnp.asarray(values[name], jnp.float32).reshape(-1)
        rows.append(jnp.pad(v, (0, VEC_W - w)))
    return jnp.stack(rows)                         # (n_rows, VEC_W) f32


def pack_det_params(det_backbone, detector):
    """Stack weights per shape family, pre-cast matmul weights to bf16 and
    pack all biases / LayerNorm vectors into padded f32 blobs."""
    enc, dec = det_backbone["enc"], det_backbone["dec"]
    bf = lambda a: a.astype(jnp.bfloat16)
    stack = lambda layers, name: jnp.stack([l[name] for l in layers])

    enc_dd_w = jnp.stack([jnp.stack([l["v_w"], l["o_w"]]) for l in enc])
    dec_dd_w = jnp.stack([jnp.stack([l["sa_v_w"], l["sa_o_w"], l["ca_q_w"],
                                     l["ca_k_w"], l["ca_v_w"], l["ca_o_w"]])
                          for l in dec])
    misc_vec = _pack_vec_rows(MISC_VEC_LAYOUT, {
        "dec_norm_g": det_backbone["dec_norm_g"],
        "dec_norm_b": det_backbone["dec_norm_b"],
        "branch_b": detector["branch_b"],
        "head_b": detector["head_b"]})

    return {
        "enc_qk_w": bf(stack(enc, "qk_w")),
        "enc_dd_w": bf(enc_dd_w),
        "enc_ff1_w": bf(stack(enc, "ff1_w")),
        "enc_ff2_w": bf(stack(enc, "ff2_w")),
        "enc_vec": jnp.stack([_pack_vec_rows(ENC_VEC_LAYOUT, l) for l in enc]),
        "dec_qk_w": bf(stack(dec, "sa_qk_w")),
        "dec_dd_w": bf(dec_dd_w),
        "dec_ff1_w": bf(stack(dec, "ff1_w")),
        "dec_ff2_w": bf(stack(dec, "ff2_w")),
        "dec_vec": jnp.stack([_pack_vec_rows(DEC_VEC_LAYOUT, l) for l in dec]),
        "misc_vec": misc_vec,
        "branch_w": bf(detector["branch_w"]),
        "head_w": bf(detector["head_w"]),
        "query_embed": det_backbone["query_embed"].astype(jnp.float32),
    }


# ============================== glue ======================================

def sine_pos_encoding(not_mask, d_model):
    """DETR sine positional encoding. not_mask: (B, H, W) float, 1 = valid."""
    num_pos_feats = d_model // 2
    y_embed = jnp.cumsum(not_mask, axis=1)
    x_embed = jnp.cumsum(not_mask, axis=2)
    eps = 1e-6
    scale = 2.0 * math.pi
    y_embed = y_embed / (y_embed[:, -1:, :] + eps) * scale
    x_embed = x_embed / (x_embed[:, :, -1:] + eps) * scale
    dim_t = jnp.arange(num_pos_feats, dtype=jnp.float32)
    dim_t = 10000.0 ** (2.0 * jnp.floor(dim_t / 2.0) / num_pos_feats)
    pos_x = x_embed[..., None] / dim_t
    pos_y = y_embed[..., None] / dim_t
    pos_x = jnp.stack([jnp.sin(pos_x[..., 0::2]), jnp.cos(pos_x[..., 1::2])],
                      axis=-1).reshape(*pos_x.shape[:-1], -1)
    pos_y = jnp.stack([jnp.sin(pos_y[..., 0::2]), jnp.cos(pos_y[..., 1::2])],
                      axis=-1).reshape(*pos_y.shape[:-1], -1)
    return jnp.concatenate([pos_y, pos_x], axis=-1)


def cond_lstr_2d_res34_forward(params, img_nchw, img_metas):
    bsz, _, H_, W_ = img_nchw.shape
    x = jnp.transpose(img_nchw, (0, 2, 3, 1)).astype(jnp.float32)  # NCHW -> NHWC
    pad_mask = jnp.ones((bsz, H_, W_), dtype=bool)
    for i, meta in enumerate(img_metas):
        h, w = meta["img_shape"][:2]
        pad_mask = pad_mask.at[i, :h, :w].set(False)

    img_feat = img_backbone(x, params["img_backbone"])             # (B, Hf, Wf, D)
    Hf, Wf = img_feat.shape[1], img_feat.shape[2]
    # F.interpolate(pad_mask, size=(Hf, Wf), mode='nearest')
    ys = jnp.arange(Hf) * (H_ // Hf)
    xs = jnp.arange(Wf) * (W_ // Wf)
    src_mask = pad_mask[:, ys][:, :, xs]                            # (B, Hf, Wf)

    L = Hf * Wf
    not_mask = 1.0 - src_mask.astype(jnp.float32)
    pos = sine_pos_encoding(not_mask, D_MODEL).reshape(bsz, L, D_MODEL)
    src = img_feat.reshape(bsz, L, D_MODEL)
    key_bias = jnp.where(src_mask.reshape(bsz, 1, L), -1e9, 0.0).astype(jnp.float32)

    packed = pack_det_params(params["det_backbone"], params["detector"])
    logits, masks = run_transformer_detector(src, pos, key_bias, packed)

    # TODO(synk): CondLSTR2D post-processing (score_thresh filtering, row-wise
    #             lane-point decoding, line_width/min_points logic) has no clean
    #             Pallas equivalent and is omitted; only logits + masks returned.
    return {"pred_logits": logits,
            "pred_masks": masks.reshape(bsz, NUM_QUERIES, Hf, Wf)}


# ============================ parameter init ===============================

def init_params(key):
    keys = iter(jax.random.split(key, 512))
    D, FF = D_MODEL, DIM_FF

    def rnd(shape, s=0.02):
        return s * jax.random.normal(next(keys), shape, jnp.float32)

    def conv_p(cin, cout, k=3):
        return {"w": 0.05 * jax.random.normal(next(keys), (k, k, cin, cout), jnp.float32),
                "gamma": jnp.ones((cout,), jnp.float32) + rnd((cout,), 0.01),
                "beta": rnd((cout,), 0.01),
                "mean": jnp.zeros((cout,), jnp.float32),
                "var": jnp.ones((cout,), jnp.float32)}

    ones = lambda s: jnp.ones(s, jnp.float32)
    zeros = lambda s: jnp.zeros(s, jnp.float32)

    def enc_layer_p():
        return {"qk_w": rnd((D, 2 * D)), "qk_b": zeros((2 * D,)),
                "v_w": rnd((D, D)), "v_b": zeros((D,)),
                "o_w": rnd((D, D)), "o_b": zeros((D,)),
                "ln1_g": ones((D,)), "ln1_b": zeros((D,)),
                "ff1_w": rnd((D, FF)), "ff1_b": zeros((FF,)),
                "ff2_w": rnd((FF, D)), "ff2_b": zeros((D,)),
                "ln2_g": ones((D,)), "ln2_b": zeros((D,))}

    def dec_layer_p():
        return {"sa_qk_w": rnd((D, 2 * D)), "sa_qk_b": zeros((2 * D,)),
                "sa_v_w": rnd((D, D)), "sa_v_b": zeros((D,)),
                "sa_o_w": rnd((D, D)), "sa_o_b": zeros((D,)),
                "ln1_g": ones((D,)), "ln1_b": zeros((D,)),
                "ca_q_w": rnd((D, D)), "ca_q_b": zeros((D,)),
                "ca_k_w": rnd((D, D)), "ca_k_b": zeros((D,)),
                "ca_v_w": rnd((D, D)), "ca_v_b": zeros((D,)),
                "ca_o_w": rnd((D, D)), "ca_o_b": zeros((D,)),
                "ln2_g": ones((D,)), "ln2_b": zeros((D,)),
                "ff1_w": rnd((D, FF)), "ff1_b": zeros((FF,)),
                "ff2_w": rnd((FF, D)), "ff2_b": zeros((D,)),
                "ln3_g": ones((D,)), "ln3_b": zeros((D,))}

    return {
        "img_backbone": {
            "stem": conv_p(IMG_C, 16),
            "down1": conv_p(16, 32),
            "res_a": conv_p(32, 32),
            "res_b": conv_p(32, 32),
            "down2": conv_p(32, D_MODEL),
        },
        "det_backbone": {
            "enc": [enc_layer_p() for _ in range(NUM_ENC_LAYERS)],
            "dec": [dec_layer_p() for _ in range(NUM_DEC_LAYERS)],
            "dec_norm_g": ones((D,)),
            "dec_norm_b": zeros((D,)),
            "query_embed": rnd((NUM_QUERIES, D)),
        },
        "detector": {
            "branch_w": rnd((D, BRANCH_CH)),
            "branch_b": zeros((BRANCH_CH,)),
            # fused cls (21) + controller (BRANCH_CH weights + 1 bias) head
            "head_w": rnd((D, HEAD_W)),
            "head_b": zeros((HEAD_W,)),
        },
    }


# ================================ main =====================================

if __name__ == "__main__":
    key = jax.random.PRNGKey(0)
    pkey, xkey = jax.random.split(key)
    params = init_params(pkey)
    img = jax.random.normal(xkey, (B, IMG_C, IMG_H, IMG_W), jnp.float32)
    # second image is "padded" (smaller valid region) to exercise the mask path
    img_metas = [{"img_shape": (IMG_H, IMG_W, 3)},
                 {"img_shape": (24, 28, 3)}]

    ret = cond_lstr_2d_res34_forward(params, img, img_metas)
    jax.block_until_ready(ret)

    assert ret["pred_logits"].shape == (B, NUM_QUERIES, NUM_CLASSES)
    assert ret["pred_masks"].shape == (B, NUM_QUERIES, IMG_H // 8, IMG_W // 8)
    assert bool(jnp.all(jnp.isfinite(ret["pred_logits"])))
    assert bool(jnp.all(jnp.isfinite(ret["pred_masks"])))
    print("KERNEL_OK")
</pallas_src>

<mosaic_0001>
module attributes {stable_mosaic.version = 11 : i64} {
  func.func @_probe(%arg0: i32, %arg1: memref<8x128xf32, #tpu.memory_space<vmem>>, %arg2: memref<8x128xf32, #tpu.memory_space<vmem>>, %arg3: memref<8x128xf32, #tpu.memory_space<vmem>>) attributes {dimension_semantics = [#tpu.dimension_semantics<arbitrary>], iteration_bounds = array<i64: 2>, scalar_prefetch = 0 : i64, scratch_operands = 0 : i64, tpu.core_type = #tpu.core_type<tc>, window_params = [{transform_indices = @transform_0, window_bounds = array<i64: 8, 128>}, {pipeline_mode = #tpu.pipeline_mode<synchronous>, transform_indices = @transform_1, window_bounds = array<i64: 8, 128>}, {transform_indices = @transform_2, window_bounds = array<i64: 8, 128>}]} {
    %c0 = arith.constant 0 : index
    %c0_0 = arith.constant 0 : index
    %0 = vector.load %arg1[%c0, %c0_0] : memref<8x128xf32, #tpu.memory_space<vmem>>, vector<8x128xf32>
    %c0_1 = arith.constant 0 : index
    %c0_2 = arith.constant 0 : index
    %1 = vector.load %arg2[%c0_1, %c0_2] : memref<8x128xf32, #tpu.memory_space<vmem>>, vector<8x128xf32>
    %2 = arith.addf %0, %1 : vector<8x128xf32>
    %c0_3 = arith.constant 0 : index
    %c0_4 = arith.constant 0 : index
    %3 = vector.load %arg3[%c0_3, %c0_4] : memref<8x128xf32, #tpu.memory_space<vmem>>, vector<8x128xf32>
    tpu.vector_store %arg3[%c0_3, %c0_4], %2 {strides = array<i32>} : memref<8x128xf32, #tpu.memory_space<vmem>>, vector<8x128xf32>,
    return
  }
  func.func @transform_0(%arg0: i32) -> (i32, i32) {
    %c0_i32 = arith.constant 0 : i32
    %c0_i32_0 = arith.constant 0 : i32
    return %arg0, %c0_i32 : i32, i32
  }
  func.func @transform_1(%arg0: i32) -> (i32, i32) {
    %c0_i32 = arith.constant 0 : i32
    %c0_i32_0 = arith.constant 0 : i32
    %c0_i32_1 = arith.constant 0 : i32
    return %c0_i32, %c0_i32_0 : i32, i32
  }
  func.func @transform_2(%arg0: i32) -> (i32, i32) {
    %c0_i32 = arith.constant 0 : i32
    %c0_i32_0 = arith.constant 0 : i32
    return %arg0, %c0_i32 : i32, i32
  }
}

module attributes {stable_mosaic.version = 11 : i64} {
  func.func @_conv_kernel(%arg0: i32, %arg1: memref<512x27xbf16, #tpu.memory_space<vmem>>, %arg2: memref<27x16xbf16, #tpu.memory_space<vmem>>, %arg3: memref<1x16xf32, #tpu.memory_space<vmem>>, %arg4: memref<1x16xf32, #tpu.memory_space<vmem>>, %arg5: memref<512x16xf32, #tpu.memory_space<vmem>>) attributes {dimension_semantics = [#tpu.dimension_semantics<parallel>], iteration_bounds = array<i64: 1>, scalar_prefetch = 0 : i64, scratch_operands = 0 : i64, tpu.core_type = #tpu.core_type<tc>, window_params = [{transform_indices = @transform_0, window_bounds = array<i64: 512, 27>}, {pipeline_mode = #tpu.pipeline_mode<synchronous>, transform_indices = @transform_1, window_bounds = array<i64: 27, 16>}, {pipeline_mode = #tpu.pipeline_mode<synchronous>, transform_indices = @transform_2, window_bounds = array<i64: 1, 16>}, {pipeline_mode = #tpu.pipeline_mode<synchronous>, transform_indices = @transform_3, window_bounds = array<i64: 1, 16>}, {transform_indices = @transform_4, window_bounds = array<i64: 512, 16>}]} {
    %c0 = arith.constant 0 : index
    %c0_0 = arith.constant 0 : index
    %0 = vector.load %arg1[%c0, %c0_0] : memref<512x27xbf16, #tpu.memory_space<vmem>>, vector<512x27xbf16>
    %c0_1 = arith.constant 0 : index
    %c0_2 = arith.constant 0 : index
    %1 = vector.load %arg2[%c0_1, %c0_2] : memref<27x16xbf16, #tpu.memory_space<vmem>>, vector<27x16xbf16>
    %cst = arith.constant dense<0.000000e+00> : vector<512x16xf32>
    %2 = tpu.matmul %0, %1, %cst {dimension_numbers = #tpu.dot_dimension_numbers<[1], [0], [0], [1], [0, 0, 1, 1], [], []>} : vector<512x27xbf16>, vector<27x16xbf16>, vector<512x16xf32> -> vector<512x16xf32>
    %c0_3 = arith.constant 0 : index
    %c0_4 = arith.constant 0 : index
    %3 = vector.load %arg3[%c0_3, %c0_4] : memref<1x16xf32, #tpu.memory_space<vmem>>, vector<1x16xf32>
    %4 = vector.broadcast %3 : vector<1x16xf32> to vector<512x16xf32>
    %5 = arith.mulf %2, %4 : vector<512x16xf32>
    %c0_5 = arith.constant 0 : index
    %c0_6 = arith.constant 0 : index
    %6 = vector.load %arg4[%c0_5, %c0_6] : memref<1x16xf32, #tpu.memory_space<vmem>>, vector<1x16xf32>
    %7 = vector.broadcast %6 : vector<1x16xf32> to vector<512x16xf32>
    %8 = arith.addf %5, %7 : vector<512x16xf32>
    %cst_7 = arith.constant 0.000000e+00 : f32
    %9 = vector.broadcast %cst_7 : f32 to vector<512x16xf32>
    %10 = arith.maximumf %8, %9 : vector<512x16xf32>
    %c0_8 = arith.constant 0 : index
    %c0_9 = arith.constant 0 : index
    %11 = vector.load %arg5[%c0_8, %c0_9] : memref<512x16xf32, #tpu.memory_space<vmem>>, vector<512x16xf32>
    tpu.vector_store %arg5[%c0_8, %c0_9], %10 {strides = array<i32>} : memref<512x16xf32, #tpu.memory_space<vmem>>, vector<512x16xf32>,
    return
  }
  func.func @transform_0(%arg0: i32) -> (i32, i32) {
    %c0_i32 = arith.constant 0 : i32
    %c0_i32_0 = arith.constant 0 : i32
    return %arg0, %c0_i32 : i32, i32
  }
  func.func @transform_1(%arg0: i32) -> (i32, i32) {
    %c0_i32 = arith.constant 0 : i32
    %c0_i32_0 = arith.constant 0 : i32
    %c0_i32_1 = arith.constant 0 : i32
    return %c0_i32, %c0_i32_0 : i32, i32
  }
  func.func @transform_2(%arg0: i32) -> (i32, i32) {
    %c0_i32 = arith.constant 0 : i32
    %c0_i32_0 = arith.constant 0 : i32
    %c0_i32_1 = arith.constant 0 : i32
    return %c0_i32, %c0_i32_0 : i32, i32
  }
  func.func @transform_3(%arg0: i32) -> (i32, i32) {
    %c0_i32 = arith.constant 0 : i32
    %c0_i32_0 = arith.constant 0 : i32
    %c0_i32_1 = arith.constant 0 : i32
    return %c0_i32, %c0_i32_0 : i32, i32
  }
  func.func @transform_4(%arg0: i32) -> (i32, i32) {
    %c0_i32 = arith.constant 0 : i32
    %c0_i32_0 = arith.constant 0 : i32
    return %arg0, %c0_i32 : i32, i32
  }
}

</mosaic_0001>

<llo_original>
// kernel: tpu_custom_call.1
$region0: #{tpu_custom_call.1}
  #allocation0 [shape = 'u32[]', space=smem, size = 0x4, offset = 0x4, fixed_abs, tag = 'smem constant byte address 0x4 - core index']
  #allocation1 [shape = 'u32[144,128]{1,0:T(1,128)}', space=vmem, size = 0x12000, scoped, tag = 'internal scratch']
  %s0 = inlined_call_operand.hbm [shape: f32[16,128], index: 0, kind: input, shape index: {}]
  %s1 = inlined_call_operand.hbm [shape: f32[8,128], index: 1, kind: input, shape index: {}]
  %s2 = inlined_call_operand.hbm [shape: f32[16,128], index: 2, kind: output, shape index: {}]
  %s3 = sld [smem:[#allocation0]]
  $region49: #{tpu_custom_call.1} parent=0
    _
  %s5 = ssub.s32 1, %s3
  %s6 = scalar_select 0, %s5, %s3
  $region1: #{tpu_custom_call.1} parent=0
    #allocation2 [shape = 'u8[8192]{0}', space=vmem, size = 0x2000, scoped, tag = 'input window, operand 0']
    #allocation3 [shape = 's32[2]{0}', space=sflag, size = 0x8, scoped, tag = 'scoped memory for tpu_custom_call.1']
    #allocation4 [shape = 's32[2]{0}', space=sflag, size = 0x8, scoped, tag = 'scoped memory for tpu_custom_call.1']
    #allocation5 [shape = 'u8[4096]{0}', space=vmem, size = 0x1000, scoped, tag = 'input window, operand 1, single buffered']
    #allocation6 [shape = 's32[1]{0}', space=sflag, size = 0x4, scoped, tag = 'scoped memory for tpu_custom_call.1']
    #allocation7 [shape = 'u8[8192]{0}', space=vmem, size = 0x2000, scoped, tag = 'output window, operand 0']
    %7 = vsyncpa [#allocation3], 0
    %s8 = scalar_lea.sflag [#allocation3], 1
    %9 = vsyncpa %s8, 0
    %10 = vsyncpa [#allocation6], 0
    %11 = vsyncpa [#allocation4], 0
    %s12 = scalar_lea.sflag [#allocation4], 1
    %13 = vsyncpa %s12, 0
    loop: start=0, step=1, limit=4
    $region2: #{tpu_custom_call.1} parent=1 // loop_pre_header
      _
    $region3: #{tpu_custom_call.1} parent=1 // loop_header
      %s15 = sphi 0, %s19
      %p16 = scmp.ge.s32.totalorder %s15, 4
      %s25 = sphi 0, %s27
      %s28 = sphi 0, %s25
      %s29 = sphi 0, %s28
      %s45 = sphi 0, %s29
      %s49 = sphi 0, %s49
      %s51 = sphi 0, %s49
      %s52 = sphi 0, %s51
      %s66 = sphi 0, %s52
      %s72 = sphi 0, %s74
      %s75 = sphi 0, %s72
      %s76 = sphi 0, %s75
      %s92 = sphi 0, %s76
    $region4: #{tpu_custom_call.1} parent=1 // loop_header_branch
      %18 = sbr.rel (%p16) target = $region8
    $region5: #{tpu_custom_call.1} parent=1 // loop_body
      %s20 = ssub.s32 %s15, 1
      %s21 = ssub.s32 %s15, 2
      %s22 = sadd.s32 %s15, 1
      %s23 = ssub.s32 %s15, %s22
      %p24 = scmp.eq.s32.totalorder %s23, 0
      %s26 = sadd.s32 %s25, 1
      %s27 = scalar_select %p24, %s25, %s26
      %p30 = pneg %p24
      %p31 = scmp.eq.s32.totalorder %s15, 1
      %p32 = por %p30, %p31
      %p33 = scmp.ne.s32.totalorder %s25, %s28
      %p34 = scmp.eq.s32.totalorder %s15, 0
      %p35 = por %p33, %p34
      %p36 = scmp.ne.s32.totalorder %s25, %s28
      %p37 = scmp.eq.s32.totalorder %s20, 1
      %p38 = por %p36, %p37
      %p39 = scmp.ne.s32.totalorder %s28, %s29
      %p40 = scmp.eq.s32.totalorder %s20, 0
      %p41 = por %p39, %p40
      %p42 = scmp.ne.s32.totalorder %s28, %s29
      %p43 = scmp.eq.s32.totalorder %s21, 1
      %p44 = por %p42, %p43
      %p46 = scmp.ne.s32.totalorder %s29, %s45
      %p47 = scmp.eq.s32.totalorder %s21, 0
      %p48 = por %p46, %p47
      %s50 = sadd.s32 %s49, 1
      %p53 = scmp.eq.s32.totalorder %s15, 1
      %p54 = scmp.ne.s32.totalorder %s49, %s51
      %p55 = scmp.eq.s32.totalorder %s15, 0
      %p56 = por %p54, %p55
      %p57 = scmp.ne.s32.totalorder %s49, %s51
      %p58 = scmp.eq.s32.totalorder %s20, 1
      %p59 = por %p57, %p58
      %p60 = scmp.ne.s32.totalorder %s51, %s52
      %p61 = scmp.eq.s32.totalorder %s20, 0
      %p62 = por %p60, %p61
      %p63 = scmp.ne.s32.totalorder %s51, %s52
      %p64 = scmp.eq.s32.totalorder %s21, 1
      %p65 = por %p63, %p64
      %p67 = scmp.ne.s32.totalorder %s52, %s66
      %p68 = scmp.eq.s32.totalorder %s21, 0
      %p69 = por %p67, %p68
      %s70 = ssub.s32 %s15, %s22
      %p71 = scmp.eq.s32.totalorder %s70, 0
      %s73 = sadd.s32 %s72, 1
      %s74 = scalar_select %p71, %s72, %s73
      %p77 = pneg %p71
      %p78 = scmp.eq.s32.totalorder %s15, 1
      %p79 = por %p77, %p78
      %p80 = scmp.ne.s32.totalorder %s72, %s75
      %p81 = scmp.eq.s32.totalorder %s15, 0
      %p82 = por %p80, %p81
      %p83 = scmp.ne.s32.totalorder %s72, %s75
      %p84 = scmp.eq.s32.totalorder %s20, 1
      %p85 = por %p83, %p84
      %p86 = scmp.ne.s32.totalorder %s75, %s76
      %p87 = scmp.eq.s32.totalorder %s20, 0
      %p88 = por %p86, %p87
      %p89 = scmp.ne.s32.totalorder %s75, %s76
      %p90 = scmp.eq.s32.totalorder %s21, 1
      %p91 = por %p89, %p90
      %p93 = scmp.ne.s32.totalorder %s76, %s92
      %p94 = scmp.eq.s32.totalorder %s21, 0
      %p95 = por %p93, %p94
      %p96 = scmp.le.s32.totalorder 1, %s15
      %p97 = scmp.lt.s32.totalorder %s15, 3
      %p98 = pnand %p96, %p97
      %p99 = pneg %p98
      // Predicated region
      $region9: #{tpu_custom_call.1} parent=5 // pred_check
        _
      $region10: #{tpu_custom_call.1} parent=5 // pred_check_branch
        %101 = sbr.rel (%p98) target = $region12
      $region11: #{tpu_custom_call.1} parent=5 // pred_region
        %s102 = ssub.s32 %s15, 1
        // Predicated region
        $region13: #{tpu_custom_call.1} parent=11 // pred_check
          %p103 = pneg %p62
        $region14: #{tpu_custom_call.1} parent=11 // pred_check_branch
          %105 = sbr.rel (%p103) target = $region16
        $region15: #{tpu_custom_call.1} parent=11 // pred_region
          %s107 = ssub.s32 128, 128
          %108 = vsyncadd [#allocation6], %s107
          %s110 = sshll.u32 [#allocation5], 4
          %s111 = int_to_ptr.vmem [resolvable:$true] %s110
          %113 = dma.hbm_to_vmem [thread:$0]  %s1, 128, %s111, [#allocation6]
        $region16: #{tpu_custom_call.1} parent=11 // pred_fallthru
          _
      $region12: #{tpu_custom_call.1} parent=5 // pred_fallthru
        _
      %p114 = scmp.lt.s32.totalorder %s15, 2
      // Predicated region
      $region17: #{tpu_custom_call.1} parent=5 // pred_check
        %p115 = pneg %p114
      $region18: #{tpu_custom_call.1} parent=5 // pred_check_branch
        %117 = sbr.rel (%p115) target = $region20
      $region19: #{tpu_custom_call.1} parent=5 // pred_region
        // Predicated region
        $region21: #{tpu_custom_call.1} parent=19 // pred_check
          %p118 = pneg %p35
        $region22: #{tpu_custom_call.1} parent=19 // pred_check_branch
          %120 = sbr.rel (%p118) target = $region24
        $region23: #{tpu_custom_call.1} parent=19 // pred_region
          %s121 = sand.u32 %s25, 1
          %s122 = scalar_lea.sflag [#allocation3], %s121
          %s123 = sand.u32 %s25, 1
          %s124 = smul.addr %s123, 8
          %s125 = scalar_lea.vmem [#allocation2], %s124
          %s127 = ssub.s32 128, 128
          %128 = vsyncadd %s122, %s127
          %s129 = smul.addr %s15, 128
          %s130 = scalar_lea.hbm %s0, %s129
          %s132 = sshll.u32 %s125, 4
          %s133 = int_to_ptr.vmem [resolvable:$true] %s132
          %135 = dma.hbm_to_vmem [thread:$0]  %s130, 128, %s133, %s122
        $region24: #{tpu_custom_call.1} parent=19 // pred_fallthru
          _
      $region20: #{tpu_custom_call.1} parent=5 // pred_fallthru
        _
      %p136 = scmp.le.s32.totalorder 1, %s15
      %p137 = scmp.lt.s32.totalorder %s15, 3
      %p138 = pnand %p136, %p137
      %p139 = pneg %p138
      // Predicated region
      $region25: #{tpu_custom_call.1} parent=5 // pred_check
        _
      $region26: #{tpu_custom_call.1} parent=5 // pred_check_branch
        %141 = sbr.rel (%p138) target = $region28
      $region27: #{tpu_custom_call.1} parent=5 // pred_region
        %s142 = ssub.s32 %s15, 1
        %s143 = sand.u32 %s28, 1
        %s144 = scalar_lea.sflag [#allocation3], %s143
        %s145 = sand.u32 %s28, 1
        %s146 = smul.addr %s145, 8
        %s147 = scalar_lea.vmem [#allocation2], %s146
        // Predicated region
        $region29: #{tpu_custom_call.1} parent=27 // pred_check
          %p148 = pneg %p41
        $region30: #{tpu_custom_call.1} parent=27 // pred_check_branch
          %150 = sbr.rel (%p148) target = $region32
        $region31: #{tpu_custom_call.1} parent=27 // pred_region
          %151 = dma.done %s144, 128
        $region32: #{tpu_custom_call.1} parent=27 // pred_fallthru
          _
        // Predicated region
        $region33: #{tpu_custom_call.1} parent=27 // pred_check
          %p152 = pneg %p62
        $region34: #{tpu_custom_call.1} parent=27 // pred_check_branch
          %154 = sbr.rel (%p152) target = $region36
        $region35: #{tpu_custom_call.1} parent=27 // pred_region
          %155 = dma.done [#allocation6], 128
        $region36: #{tpu_custom_call.1} parent=27 // pred_fallthru
          _
        %s156 = sand.u32 %s28, 1
        %s157 = scalar_lea.sflag [#allocation3], %s156
        %s158 = sand.u32 %s28, 1
        %s159 = smul.addr %s158, 8
        %s160 = scalar_lea.vmem [#allocation2], %s159
        %p161 = pneg %p41
        %p162 = pneg %p38
        %p163 = pneg %p62
        %p164 = pneg %p59
        %p165 = pneg %p88
        %p166 = pneg %p85
        %s167 = sand.u32 %s75, 1
        %s168 = scalar_lea.sflag [#allocation4], %s167
        %s169 = sand.u32 %s75, 1
        %s170 = smul.addr %s169, 8
        %s171 = scalar_lea.vmem [#allocation7], %s170
        %v172 = vld [vmem:[%s147] sm:$0xff]
        %v173 = vld [vmem:[#allocation5] sm:$0xff]
        %v174 = vadd.f32 %v172, %v173
        %175 = vst [vmem:[%s171] sm:$0xff] %v174
        %s176 = sand.u32 %s75, 1
        %s177 = scalar_lea.sflag [#allocation4], %s176
        %s178 = sand.u32 %s75, 1
        %s179 = smul.addr %s178, 8
        %s180 = scalar_lea.vmem [#allocation7], %s179
        // Predicated region
        $region37: #{tpu_custom_call.1} parent=27 // pred_check
          %p181 = pneg %p85
        $region38: #{tpu_custom_call.1} parent=27 // pred_check_branch
          %183 = sbr.rel (%p181) target = $region40
        $region39: #{tpu_custom_call.1} parent=27 // pred_region
          %s185 = ssub.s32 128, 128
          %186 = vsyncadd %s177, %s185
          %s187 = smul.addr %s20, 128
          %s188 = scalar_lea.hbm %s2, %s187
          %s190 = sshll.u32 %s180, 4
          %s191 = int_to_ptr.vmem [resolvable:$true] %s190
          %193 = dma.vmem_to_hbm [thread:$0]  %s191, 128, %s188, %s177
        $region40: #{tpu_custom_call.1} parent=27 // pred_fallthru
          _
      $region28: #{tpu_custom_call.1} parent=5 // pred_fallthru
        _
      %p194 = scmp.le.s32.totalorder 2, %s15
      // Predicated region
      $region41: #{tpu_custom_call.1} parent=5 // pred_check
        %p195 = pneg %p194
      $region42: #{tpu_custom_call.1} parent=5 // pred_check_branch
        %197 = sbr.rel (%p195) target = $region44
      $region43: #{tpu_custom_call.1} parent=5 // pred_region
        %s198 = ssub.s32 %s15, 2
        // Predicated region
        $region45: #{tpu_custom_call.1} parent=43 // pred_check
          %p199 = pneg %p91
        $region46: #{tpu_custom_call.1} parent=43 // pred_check_branch
          %201 = sbr.rel (%p199) target = $region48
        $region47: #{tpu_custom_call.1} parent=43 // pred_region
          %s202 = sand.u32 %s76, 1
          %s203 = scalar_lea.sflag [#allocation4], %s202
          %s204 = sand.u32 %s76, 1
          %s205 = smul.addr %s204, 8
          %s206 = scalar_lea.vmem [#allocation7], %s205
          %207 = dma.done %s203, 128
        $region48: #{tpu_custom_call.1} parent=43 // pred_fallthru
          _
      $region44: #{tpu_custom_call.1} parent=5 // pred_fallthru
        _
    $region6: #{tpu_custom_call.1} parent=1 // loop_footer
      %s19 = sadd.s32 1, %s15
    $region7: #{tpu_custom_call.1} parent=1 // loop_footer_branch
      %14 = sbr.rel target = $region3
    $region8: #{tpu_custom_call.1} parent=1 // loop_exit
      _
    %208 = vsyncpa [#allocation3], 1
    %s209 = scalar_lea.sflag [#allocation3], 1
    %210 = vsyncpa %s209, 1
    %211 = vsyncpa [#allocation6], 1
    %212 = vsyncpa [#allocation4], 1
    %s213 = scalar_lea.sflag [#allocation4], 1
    %214 = vsyncpa %s213, 1

// kernel: tpu_custom_call.1
$region0: #{tpu_custom_call.1}
  #allocation0 [shape = 'u32[]', space=smem, size = 0x4, offset = 0x4, fixed_abs, tag = 'smem constant byte address 0x4 - core index']
  #allocation1 [shape = 'u32[144,128]{1,0:T(1,128)}', space=vmem, size = 0x12000, scoped, tag = 'internal scratch']
  %s0 = inlined_call_operand.vmem [shape: bf16[512,27], index: 0, kind: input, shape index: {}]
  %s1 = inlined_call_operand.vmem [shape: bf16[27,16], index: 1, kind: input, shape index: {}]
  %s2 = inlined_call_operand.vmem [shape: f32[1,16], index: 2, kind: input, shape index: {}]
  %s3 = inlined_call_operand.vmem [shape: f32[1,16], index: 3, kind: input, shape index: {}]
  %s4 = inlined_call_operand.vmem [shape: f32[512,16], index: 4, kind: output, shape index: {}]
  %s5 = sld [smem:[#allocation0]]
  $region26: #{tpu_custom_call.1} parent=0
    _
  %s7 = ssub.s32 1, %s5
  %s8 = scalar_select 0, %s7, %s5
  // Predicated region
  $region2: #{tpu_custom_call.1} parent=0 // pred_check
    _
  $region3: #{tpu_custom_call.1} parent=0 // pred_check_branch
    %10 = sbr.rel (0) target = $region5
  $region4: #{tpu_custom_call.1} parent=0 // pred_region
    _
  $region5: #{tpu_custom_call.1} parent=0 // pred_fallthru
    _
  // Predicated region
  $region6: #{tpu_custom_call.1} parent=0 // pred_check
    _
  $region7: #{tpu_custom_call.1} parent=0 // pred_check_branch
    %12 = sbr.rel (0) target = $region9
  $region8: #{tpu_custom_call.1} parent=0 // pred_region
    _
  $region9: #{tpu_custom_call.1} parent=0 // pred_fallthru
    _
  // Predicated region
  $region10: #{tpu_custom_call.1} parent=0 // pred_check
    _
  $region11: #{tpu_custom_call.1} parent=0 // pred_check_branch
    %14 = sbr.rel (0) target = $region13
  $region12: #{tpu_custom_call.1} parent=0 // pred_region
    _
  $region13: #{tpu_custom_call.1} parent=0 // pred_fallthru
    _
  // Predicated region
  $region14: #{tpu_custom_call.1} parent=0 // pred_check
    _
  $region15: #{tpu_custom_call.1} parent=0 // pred_check_branch
    %16 = sbr.rel (0) target = $region17
  $region16: #{tpu_custom_call.1} parent=0 // pred_region
    _
  $region17: #{tpu_custom_call.1} parent=0 // pred_fallthru
    _
  %v18 = vld [vmem:[%s0] sm:$0xf]
  %v19 = vld [vmem:[%s0 + $0x4] sm:$0xf]
  %v20 = vld [vmem:[%s0 + $0x8] sm:$0xf]
  %v21 = vld [vmem:[%s0 + $0xc] sm:$0xf]
  %v22 = vld [vmem:[%s0 + $0x10] sm:$0xf]
  %v23 = vld [vmem:[%s0 + $0x14] sm:$0xf]
  %v24 = vld [vmem:[%s0 + $0x18] sm:$0xf]
  %v25 = vld [vmem:[%s0 + $0x1c] sm:$0xf]
  %v26 = vld [vmem:[%s0 + $0x20] sm:$0xf]
  %v27 = vld [vmem:[%s0 + $0x24] sm:$0xf]
  %v28 = vld [vmem:[%s0 + $0x28] sm:$0xf]
  %v29 = vld [vmem:[%s0 + $0x2c] sm:$0xf]
  %v30 = vld [vmem:[%s0 + $0x30] sm:$0xf]
  %v31 = vld [vmem:[%s0 + $0x34] sm:$0xf]
  %v32 = vld [vmem:[%s0 + $0x38] sm:$0xf]
  %v33 = vld [vmem:[%s0 + $0x3c] sm:$0xf]
  %v34 = vld [vmem:[%s0 + $0x40] sm:$0xf]
  %v35 = vld [vmem:[%s0 + $0x44] sm:$0xf]
  %v36 = vld [vmem:[%s0 + $0x48] sm:$0xf]
  %v37 = vld [vmem:[%s0 + $0x4c] sm:$0xf]
  %v38 = vld [vmem:[%s0 + $0x50] sm:$0xf]
  %v39 = vld [vmem:[%s0 + $0x54] sm:$0xf]
  %v40 = vld [vmem:[%s0 + $0x58] sm:$0xf]
  %v41 = vld [vmem:[%s0 + $0x5c] sm:$0xf]
  %v42 = vld [vmem:[%s0 + $0x60] sm:$0xf]
  %v43 = vld [vmem:[%s0 + $0x64] sm:$0xf]
  %v44 = vld [vmem:[%s0 + $0x68] sm:$0xf]
  %v45 = vld [vmem:[%s0 + $0x6c] sm:$0xf]
  %v46 = vld [vmem:[%s0 + $0x70] sm:$0xf]
  %v47 = vld [vmem:[%s0 + $0x74] sm:$0xf]
  %v48 = vld [vmem:[%s0 + $0x78] sm:$0xf]
  %v49 = vld [vmem:[%s0 + $0x7c] sm:$0xf]
  %v50 = vld [vmem:[%s0 + $0x80] sm:$0xf]
  %v51 = vld [vmem:[%s0 + $0x84] sm:$0xf]
  %v52 = vld [vmem:[%s0 + $0x88] sm:$0xf]
  %v53 = vld [vmem:[%s0 + $0x8c] sm:$0xf]
  %v54 = vld [vmem:[%s0 + $0x90] sm:$0xf]
  %v55 = vld [vmem:[%s0 + $0x94] sm:$0xf]
  %v56 = vld [vmem:[%s0 + $0x98] sm:$0xf]
  %v57 = vld [vmem:[%s0 + $0x9c] sm:$0xf]
  %v58 = vld [vmem:[%s0 + $0xa0] sm:$0xf]
  %v59 = vld [vmem:[%s0 + $0xa4] sm:$0xf]
  %v60 = vld [vmem:[%s0 + $0xa8] sm:$0xf]
  %v61 = vld [vmem:[%s0 + $0xac] sm:$0xf]
  %v62 = vld [vmem:[%s0 + $0xb0] sm:$0xf]
  %v63 = vld [vmem:[%s0 + $0xb4] sm:$0xf]
  %v64 = vld [vmem:[%s0 + $0xb8] sm:$0xf]
  %v65 = vld [vmem:[%s0 + $0xbc] sm:$0xf]
  %v66 = vld [vmem:[%s0 + $0xc0] sm:$0xf]
  %v67 = vld [vmem:[%s0 + $0xc4] sm:$0xf]
  %v68 = vld [vmem:[%s0 + $0xc8] sm:$0xf]
  %v69 = vld [vmem:[%s0 + $0xcc] sm:$0xf]
  %v70 = vld [vmem:[%s0 + $0xd0] sm:$0xf]
  %v71 = vld [vmem:[%s0 + $0xd4] sm:$0xf]
  %v72 = vld [vmem:[%s0 + $0xd8] sm:$0xf]
  %v73 = vld [vmem:[%s0 + $0xdc] sm:$0xf]
  %v74 = vld [vmem:[%s0 + $0xe0] sm:$0xf]
  %v75 = vld [vmem:[%s0 + $0xe4] sm:$0xf]
  %v76 = vld [vmem:[%s0 + $0xe8] sm:$0xf]
  %v77 = vld [vmem:[%s0 + $0xec] sm:$0xf]
  %v78 = vld [vmem:[%s0 + $0xf0] sm:$0xf]
  %v79 = vld [vmem:[%s0 + $0xf4] sm:$0xf]
  %v80 = vld [vmem:[%s0 + $0xf8] sm:$0xf]
  %v81 = vld [vmem:[%s0 + $0xfc] sm:$0xf]
  %v82 = vld [vmem:[%s1] sm:$0xf]
  %v83 = vld [vmem:[%s1 + $0x4] sm:$0xf]
  %v84 = vld [vmem:[%s1 + $0x8] sm:$0xf]
  %v85 = vld [vmem:[%s1 + $0xc] sm:$0x3]
  %v150 = vunpack.c.l.b16 %v18
  %v151 = vunpack.c.l.b16 %v19
  %v152 = vunpack.c.l.b16 %v20
  %v153 = vunpack.c.l.b16 %v21
  %v154 = vunpack.c.l.b16 %v22
  %v155 = vunpack.c.l.b16 %v23
  %v156 = vunpack.c.l.b16 %v24
  %v157 = vunpack.c.l.b16 %v25
  %v158 = vunpack.c.l.b16 %v26
  %v159 = vunpack.c.l.b16 %v27
  %v160 = vunpack.c.l.b16 %v28
  %v161 = vunpack.c.l.b16 %v29
  %v162 = vunpack.c.l.b16 %v30
  %v163 = vunpack.c.l.b16 %v31
  %v164 = vunpack.c.l.b16 %v32
  %v165 = vunpack.c.l.b16 %v33
  %v166 = vunpack.c.l.b16 %v34
  %v167 = vunpack.c.l.b16 %v35
  %v168 = vunpack.c.l.b16 %v36
  %v169 = vunpack.c.l.b16 %v37
  %v170 = vunpack.c.l.b16 %v38
  %v171 = vunpack.c.l.b16 %v39
  %v172 = vunpack.c.l.b16 %v40
  %v173 = vunpack.c.l.b16 %v41
  %v174 = vunpack.c.l.b16 %v42
  %v175 = vunpack.c.l.b16 %v43
  %v176 = vunpack.c.l.b16 %v44
  %v177 = vunpack.c.l.b16 %v45
  %v178 = vunpack.c.l.b16 %v46
  %v179 = vunpack.c.l.b16 %v47
  %v180 = vunpack.c.l.b16 %v48
  %v181 = vunpack.c.l.b16 %v49
  %v182 = vunpack.c.l.b16 %v50
  %v183 = vunpack.c.l.b16 %v51
  %v184 = vunpack.c.l.b16 %v52
  %v185 = vunpack.c.l.b16 %v53
  %v186 = vunpack.c.l.b16 %v54
  %v187 = vunpack.c.l.b16 %v55
  %v188 = vunpack.c.l.b16 %v56
  %v189 = vunpack.c.l.b16 %v57
  %v190 = vunpack.c.l.b16 %v58
  %v191 = vunpack.c.l.b16 %v59
  %v192 = vunpack.c.l.b16 %v60
  %v193 = vunpack.c.l.b16 %v61
  %v194 = vunpack.c.l.b16 %v62
  %v195 = vunpack.c.l.b16 %v63
  %v196 = vunpack.c.l.b16 %v64
  %v197 = vunpack.c.l.b16 %v65
  %v198 = vunpack.c.l.b16 %v66
  %v199 = vunpack.c.l.b16 %v67
  %v200 = vunpack.c.l.b16 %v68
  %v201 = vunpack.c.l.b16 %v69
  %v202 = vunpack.c.l.b16 %v70
  %v203 = vunpack.c.l.b16 %v71
  %v204 = vunpack.c.l.b16 %v72
  %v205 = vunpack.c.l.b16 %v73
  %v206 = vunpack.c.l.b16 %v74
  %v207 = vunpack.c.l.b16 %v75
  %v208 = vunpack.c.l.b16 %v76
  %v209 = vunpack.c.l.b16 %v77
  %v210 = vunpack.c.l.b16 %v78
  %v211 = vunpack.c.l.b16 %v79
  %v212 = vunpack.c.l.b16 %v80
  %v213 = vunpack.c.l.b16 %v81
  %v214 = vpack.c.b16 %v151, %v150
  %v215 = vpack.c.b16 %v153, %v152
  %v216 = vpack.c.b16 %v155, %v154
  %v217 = vpack.c.b16 %v157, %v156
  %v218 = vpack.c.b16 %v159, %v158
  %v219 = vpack.c.b16 %v161, %v160
  %v220 = vpack.c.b16 %v163, %v162
  %v221 = vpack.c.b16 %v165, %v164
  %v222 = vpack.c.b16 %v167, %v166
  %v223 = vpack.c.b16 %v169, %v168
  %v224 = vpack.c.b16 %v171, %v170
  %v225 = vpack.c.b16 %v173, %v172
  %v226 = vpack.c.b16 %v175, %v174
  %v227 = vpack.c.b16 %v177, %v176
  %v228 = vpack.c.b16 %v179, %v178
  %v229 = vpack.c.b16 %v181, %v180
  %v230 = vpack.c.b16 %v183, %v182
  %v231 = vpack.c.b16 %v185, %v184
  %v232 = vpack.c.b16 %v187, %v186
  %v233 = vpack.c.b16 %v189, %v188
  %v234 = vpack.c.b16 %v191, %v190
  %v235 = vpack.c.b16 %v193, %v192
  %v236 = vpack.c.b16 %v195, %v194
  %v237 = vpack.c.b16 %v197, %v196
  %v238 = vpack.c.b16 %v199, %v198
  %v239 = vpack.c.b16 %v201, %v200
  %v240 = vpack.c.b16 %v203, %v202
  %v241 = vpack.c.b16 %v205, %v204
  %v242 = vpack.c.b16 %v207, %v206
  %v243 = vpack.c.b16 %v209, %v208
  %v244 = vpack.c.b16 %v211, %v210
  %v245 = vpack.c.b16 %v213, %v212
  %v250 = vunpack.c.l.b16 %v82
  %v251 = vunpack.c.l.b16 %v83
  %v252 = vunpack.c.l.b16 %v84
  %v253 = vunpack.c.l.b16 %v85
  %v254 = vpack.c.b16 %v251, %v250
  %v255 = vpack.c.b16 %v253, %v252
  %vm257 = vcmask 220160
  %v259 = vsel %vm257, %v214, 0
  %v262 = vsel %vm257, %v215, 0
  %v265 = vsel %vm257, %v216, 0
  %v268 = vsel %vm257, %v217, 0
  %v271 = vsel %vm257, %v218, 0
  %v274 = vsel %vm257, %v219, 0
  %v277 = vsel %vm257, %v220, 0
  %v280 = vsel %vm257, %v221, 0
  %v283 = vsel %vm257, %v222, 0
  %v286 = vsel %vm257, %v223, 0
  %v289 = vsel %vm257, %v224, 0
  %v292 = vsel %vm257, %v225, 0
  %v295 = vsel %vm257, %v226, 0
  %v298 = vsel %vm257, %v227, 0
  %v301 = vsel %vm257, %v228, 0
  %v304 = vsel %vm257, %v229, 0
  %v307 = vsel %vm257, %v230, 0
  %v310 = vsel %vm257, %v231, 0
  %v313 = vsel %vm257, %v232, 0
  %v316 = vsel %vm257, %v233, 0
  %v319 = vsel %vm257, %v234, 0
  %v322 = vsel %vm257, %v235, 0
  %v325 = vsel %vm257, %v236, 0
  %v328 = vsel %vm257, %v237, 0
  %v331 = vsel %vm257, %v238, 0
  %v334 = vsel %vm257, %v239, 0
  %v337 = vsel %vm257, %v240, 0
  %v340 = vsel %vm257, %v241, 0
  %v343 = vsel %vm257, %v242, 0
  %v346 = vsel %vm257, %v243, 0
  %v349 = vsel %vm257, %v244, 0
  %v352 = vsel %vm257, %v245, 0
  %vm354 = vcmask 1044480
  %vm355 = vcmask 1045504
  %v356 = vsel %vm354, 4294967295, 65535
  %v357 = vsel %vm355, %v356, 0
  %v359 = vand.u32 %v255, %v357
  %361 = vmatprep.subr.bf16.mxu0 0
  %362 = vmatpush1.bf16.msra.mxu0 %v254
  %363 = vmatprep.subr.bf16.mxu0 0
  %364 = vmatpush1.bf16.msra.mxu0 %v359
  %365 = vmatprep.subr.bf16.mxu0 0
  %366 = vmatpush1.bf16.msra.mxu0 0
  %367 = vmatprep.subr.bf16.mxu0 0
  %368 = vmatpush1.bf16.msra.mxu0 0
  %369 = vmatprep.subr.bf16.mxu0 0
  %370 = vmatpush1.bf16.msra.mxu0 0
  %371 = vmatprep.subr.bf16.mxu0 0
  %372 = vmatpush1.bf16.msra.mxu0 0
  %373 = vmatprep.subr.bf16.mxu0 0
  %374 = vmatpush1.bf16.msra.mxu0 0
  %375 = vmatprep.subr.bf16.mxu0 0
  %376 = vmatpush1.bf16.msra.mxu0 0
  %377 = vmatprep.subr.bf16.mxu0 0
  %378 = vmatpush1.bf16.msra.mxu0 0
  %379 = vmatprep.subr.bf16.mxu0 0
  %380 = vmatpush1.bf16.msra.mxu0 0
  %381 = vmatprep.subr.bf16.mxu0 0
  %382 = vmatpush1.bf16.msra.mxu0 0
  %383 = vmatprep.subr.bf16.mxu0 0
  %384 = vmatpush1.bf16.msra.mxu0 0
  %385 = vmatprep.subr.bf16.mxu0 0
  %386 = vmatpush1.bf16.msra.mxu0 0
  %387 = vmatprep.subr.bf16.mxu0 0
  %388 = vmatpush1.bf16.msra.mxu0 0
  %389 = vmatprep.subr.bf16.mxu0 0
  %390 = vmatpush1.bf16.msra.mxu0 0
  %391 = vmatprep.subr.bf16.mxu0 0
  %392 = vmatpush1.bf16.msra.mxu0 0
  %393 = vmatprep.mubr.bf16.mxu0 0
  %394 = vmatmul.mubr.bf16.gmra.mrb[0].mxu0 %v259
  %v395 = vpop.f32.mrb[0].mxu0
  %v396 = vadd.f32 0.0, %v395
  %v397 = vpop.f32.mrb[0].mxu0
  %v398 = vpop.f32.mrb[0].mxu0
  %v399 = vadd.f32 0.0, %v398
  %v400 = vpop.f32.mrb[0].mxu0
  %401 = vmatprep.mubr.bf16.mxu0 0
  %402 = vmatmul.mubr.bf16.gmra.mrb[0].mxu0 %v262
  %v403 = vpop.f32.mrb[0].mxu0
  %v404 = vadd.f32 0.0, %v403
  %v405 = vpop.f32.mrb[0].mxu0
  %v406 = vpop.f32.mrb[0].mxu0
  %v407 = vadd.f32 0.0, %v406
  %v408 = vpop.f32.mrb[0].mxu0
  %409 = vmatprep.mubr.bf16.mxu0 0
  %410 = vmatmul.mubr.bf16.gmra.mrb[0].mxu0 %v265
  %v411 = vpop.f32.mrb[0].mxu0
  %v412 = vadd.f32 0.0, %v411
  %v413 = vpop.f32.mrb[0].mxu0
  %v414 = vpop.f32.mrb[0].mxu0
  %v415 = vadd.f32 0.0, %v414
  %v416 = vpop.f32.mrb[0].mxu0
  %417 = vmatprep.mubr.bf16.mxu0 0
  %418 = vmatmul.mubr.bf16.gmra.mrb[0].mxu0 %v268
  %v419 = vpop.f32.mrb[0].mxu0
  %v420 = vadd.f32 0.0, %v419
  %v421 = vpop.f32.mrb[0].mxu0
  %v422 = vpop.f32.mrb[0].mxu0
  %v423 = vadd.f32 0.0, %v422
  %v424 = vpop.f32.mrb[0].mxu0
  %425 = vmatprep.mubr.bf16.mxu0 0
  %426 = vmatmul.mubr.bf16.gmra.mrb[0].mxu0 %v271
  %v427 = vpop.f32.mrb[0].mxu0
  %v428 = vadd.f32 0.0, %v427
  %v429 = vpop.f32.mrb[0].mxu0
  %v430 = vpop.f32.mrb[0].mxu0
  %v431 = vadd.f32 0.0, %v430
  %v432 = vpop.f32.mrb[0].mxu0
  %433 = vmatprep.mubr.bf16.mxu0 0
  %434 = vmatmul.mubr.bf16.gmra.mrb[0].mxu0 %v274
  %v435 = vpop.f32.mrb[0].mxu0
  %v436 = vadd.f32 0.0, %v435
  %v437 = vpop.f32.mrb[0].mxu0
  %v438 = vpop.f32.mrb[0].mxu0
  %v439 = vadd.f32 0.0, %v438
  %v440 = vpop.f32.mrb[0].mxu0
  %441 = vmatprep.mubr.bf16.mxu0 0
  %442 = vmatmul.mubr.bf16.gmra.mrb[0].mxu0 %v277
  %v443 = vpop.f32.mrb[0].mxu0
  %v444 = vadd.f32 0.0, %v443
  %v445 = vpop.f32.mrb[0].mxu0
  %v446 = vpop.f32.mrb[0].mxu0
  %v447 = vadd.f32 0.0, %v446
  %v448 = vpop.f32.mrb[0].mxu0
  %449 = vmatprep.mubr.bf16.mxu0 0
  %450 = vmatmul.mubr.bf16.gmra.mrb[0].mxu0 %v280
  %v451 = vpop.f32.mrb[0].mxu0
  %v452 = vadd.f32 0.0, %v451
  %v453 = vpop.f32.mrb[0].mxu0
  %v454 = vpop.f32.mrb[0].mxu0
  %v455 = vadd.f32 0.0, %v454
  %v456 = vpop.f32.mrb[0].mxu0
  %457 = vmatprep.mubr.bf16.mxu0 0
  %458 = vmatmul.mubr.bf16.gmra.mrb[0].mxu0 %v283
  %v459 = vpop.f32.mrb[0].mxu0
  %v460 = vadd.f32 0.0, %v459
  %v461 = vpop.f32.mrb[0].mxu0
  %v462 = vpop.f32.mrb[0].mxu0
  %v463 = vadd.f32 0.0, %v462
  %v464 = vpop.f32.mrb[0].mxu0
  %465 = vmatprep.mubr.bf16.mxu0 0
  %466 = vmatmul.mubr.bf16.gmra.mrb[0].mxu0 %v286
  %v467 = vpop.f32.mrb[0].mxu0
  %v468 = vadd.f32 0.0, %v467
  %v469 = vpop.f32.mrb[0].mxu0
  %v470 = vpop.f32.mrb[0].mxu0
  %v471 = vadd.f32 0.0, %v470
  %v472 = vpop.f32.mrb[0].mxu0
  %473 = vmatprep.mubr.bf16.mxu0 0
  %474 = vmatmul.mubr.bf16.gmra.mrb[0].mxu0 %v289
  %v475 = vpop.f32.mrb[0].mxu0
  %v476 = vadd.f32 0.0, %v475
  %v477 = vpop.f32.mrb[0].mxu0
  %v478 = vpop.f32.mrb[0].mxu0
  %v479 = vadd.f32 0.0, %v478
  %v480 = vpop.f32.mrb[0].mxu0
  %481 = vmatprep.mubr.bf16.mxu0 0
  %482 = vmatmul.mubr.bf16.gmra.mrb[0].mxu0 %v292
  %v483 = vpop.f32.mrb[0].mxu0
  %v484 = vadd.f32 0.0, %v483
  %v485 = vpop.f32.mrb[0].mxu0
  %v486 = vpop.f32.mrb[0].mxu0
  %v487 = vadd.f32 0.0, %v486
  %v488 = vpop.f32.mrb[0].mxu0
  %489 = vmatprep.mubr.bf16.mxu0 0
  %490 = vmatmul.mubr.bf16.gmra.mrb[0].mxu0 %v295
  %v491 = vpop.f32.mrb[0].mxu0
  %v492 = vadd.f32 0.0, %v491
  %v493 = vpop.f32.mrb[0].mxu0
  %v494 = vpop.f32.mrb[0].mxu0
  %v495 = vadd.f32 0.0, %v494
  %v496 = vpop.f32.mrb[0].mxu0
  %497 = vmatprep.mubr.bf16.mxu0 0
  %498 = vmatmul.mubr.bf16.gmra.mrb[0].mxu0 %v298
  %v499 = vpop.f32.mrb[0].mxu0
  %v500 = vadd.f32 0.0, %v499
  %v501 = vpop.f32.mrb[0].mxu0
  %v502 = vpop.f32.mrb[0].mxu0
  %v503 = vadd.f32 0.0, %v502
  %v504 = vpop.f32.mrb[0].mxu0
  %505 = vmatprep.mubr.bf16.mxu0 0
  %506 = vmatmul.mubr.bf16.gmra.mrb[0].mxu0 %v301
  %v507 = vpop.f32.mrb[0].mxu0
  %v508 = vadd.f32 0.0, %v507
  %v509 = vpop.f32.mrb[0].mxu0
  %v510 = vpop.f32.mrb[0].mxu0
  %v511 = vadd.f32 0.0, %v510
  %v512 = vpop.f32.mrb[0].mxu0
  %513 = vmatprep.mubr.bf16.mxu0 0
  %514 = vmatmul.mubr.bf16.gmra.mrb[0].mxu0 %v304
  %v515 = vpop.f32.mrb[0].mxu0
  %v516 = vadd.f32 0.0, %v515
  %v517 = vpop.f32.mrb[0].mxu0
  %v518 = vpop.f32.mrb[0].mxu0
  %v519 = vadd.f32 0.0, %v518
  %v520 = vpop.f32.mrb[0].mxu0
  %521 = vmatprep.mubr.bf16.mxu0 0
  %522 = vmatmul.mubr.bf16.gmra.mrb[0].mxu0 %v307
  %v523 = vpop.f32.mrb[0].mxu0
  %v524 = vadd.f32 0.0, %v523
  %v525 = vpop.f32.mrb[0].mxu0
  %v526 = vpop.f32.mrb[0].mxu0
  %v527 = vadd.f32 0.0, %v526
  %v528 = vpop.f32.mrb[0].mxu0
  %529 = vmatprep.mubr.bf16.mxu0 0
  %530 = vmatmul.mubr.bf16.gmra.mrb[0].mxu0 %v310
  %v531 = vpop.f32.mrb[0].mxu0
  %v532 = vadd.f32 0.0, %v531
  %v533 = vpop.f32.mrb[0].mxu0
  %v534 = vpop.f32.mrb[0].mxu0
  %v535 = vadd.f32 0.0, %v534
  %v536 = vpop.f32.mrb[0].mxu0
  %537 = vmatprep.mubr.bf16.mxu0 0
  %538 = vmatmul.mubr.bf16.gmra.mrb[0].mxu0 %v313
  %v539 = vpop.f32.mrb[0].mxu0
  %v540 = vadd.f32 0.0, %v539
  %v541 = vpop.f32.mrb[0].mxu0
  %v542 = vpop.f32.mrb[0].mxu0
  %v543 = vadd.f32 0.0, %v542
  %v544 = vpop.f32.mrb[0].mxu0
  %545 = vmatprep.mubr.bf16.mxu0 0
  %546 = vmatmul.mubr.bf16.gmra.mrb[0].mxu0 %v316
  %v547 = vpop.f32.mrb[0].mxu0
  %v548 = vadd.f32 0.0, %v547
  %v549 = vpop.f32.mrb[0].mxu0
  %v550 = vpop.f32.mrb[0].mxu0
  %v551 = vadd.f32 0.0, %v550
  %v552 = vpop.f32.mrb[0].mxu0
  %553 = vmatprep.mubr.bf16.mxu0 0
  %554 = vmatmul.mubr.bf16.gmra.mrb[0].mxu0 %v319
  %v555 = vpop.f32.mrb[0].mxu0
  %v556 = vadd.f32 0.0, %v555
  %v557 = vpop.f32.mrb[0].mxu0
  %v558 = vpop.f32.mrb[0].mxu0
  %v559 = vadd.f32 0.0, %v558
  %v560 = vpop.f32.mrb[0].mxu0
  %561 = vmatprep.mubr.bf16.mxu0 0
  %562 = vmatmul.mubr.bf16.gmra.mrb[0].mxu0 %v322
  %v563 = vpop.f32.mrb[0].mxu0
  %v564 = vadd.f32 0.0, %v563
  %v565 = vpop.f32.mrb[0].mxu0
  %v566 = vpop.f32.mrb[0].mxu0
  %v567 = vadd.f32 0.0, %v566
  %v568 = vpop.f32.mrb[0].mxu0
  %569 = vmatprep.mubr.bf16.mxu0 0
  %570 = vmatmul.mubr.bf16.gmra.mrb[0].mxu0 %v325
  %v571 = vpop.f32.mrb[0].mxu0
  %v572 = vadd.f32 0.0, %v571
  %v573 = vpop.f32.mrb[0].mxu0
  %v574 = vpop.f32.mrb[0].mxu0
  %v575 = vadd.f32 0.0, %v574
  %v576 = vpop.f32.mrb[0].mxu0
  %577 = vmatprep.mubr.bf16.mxu0 0
  %578 = vmatmul.mubr.bf16.gmra.mrb[0].mxu0 %v328
  %v579 = vpop.f32.mrb[0].mxu0
  %v580 = vadd.f32 0.0, %v579
  %v581 = vpop.f32.mrb[0].mxu0
  %v582 = vpop.f32.mrb[0].mxu0
  %v583 = vadd.f32 0.0, %v582
  %v584 = vpop.f32.mrb[0].mxu0
  %585 = vmatprep.mubr.bf16.mxu0 0
  %586 = vmatmul.mubr.bf16.gmra.mrb[0].mxu0 %v331
  %v587 = vpop.f32.mrb[0].mxu0
  %v588 = vadd.f32 0.0, %v587
  %v589 = vpop.f32.mrb[0].mxu0
  %v590 = vpop.f32.mrb[0].mxu0
  %v591 = vadd.f32 0.0, %v590
  %v592 = vpop.f32.mrb[0].mxu0
  %593 = vmatprep.mubr.bf16.mxu0 0
  %594 = vmatmul.mubr.bf16.gmra.mrb[0].mxu0 %v334
  %v595 = vpop.f32.mrb[0].mxu0
  %v596 = vadd.f32 0.0, %v595
  %v597 = vpop.f32.mrb[0].mxu0
  %v598 = vpop.f32.mrb[0].mxu0
  %v599 = vadd.f32 0.0, %v598
  %v600 = vpop.f32.mrb[0].mxu0
  %601 = vmatprep.mubr.bf16.mxu0 0
  %602 = vmatmul.mubr.bf16.gmra.mrb[0].mxu0 %v337
  %v603 = vpop.f32.mrb[0].mxu0
  %v604 = vadd.f32 0.0, %v603
  %v605 = vpop.f32.mrb[0].mxu0
  %v606 = vpop.f32.mrb[0].mxu0
  %v607 = vadd.f32 0.0, %v606
  %v608 = vpop.f32.mrb[0].mxu0
  %609 = vmatprep.mubr.bf16.mxu0 0
  %610 = vmatmul.mubr.bf16.gmra.mrb[0].mxu0 %v340
  %v611 = vpop.f32.mrb[0].mxu0
  %v612 = vadd.f32 0.0, %v611
  %v613 = vpop.f32.mrb[0].mxu0
  %v614 = vpop.f32.mrb[0].mxu0
  %v615 = vadd.f32 0.0, %v614
  %v616 = vpop.f32.mrb[0].mxu0
  %617 = vmatprep.mubr.bf16.mxu0 0
  %618 = vmatmul.mubr.bf16.gmra.mrb[0].mxu0 %v343
  %v619 = vpop.f32.mrb[0].mxu0
  %v620 = vadd.f32 0.0, %v619
  %v621 = vpop.f32.mrb[0].mxu0
  %v622 = vpop.f32.mrb[0].mxu0
  %v623 = vadd.f32 0.0, %v622
  %v624 = vpop.f32.mrb[0].mxu0
  %625 = vmatprep.mubr.bf16.mxu0 0
  %626 = vmatmul.mubr.bf16.gmra.mrb[0].mxu0 %v346
  %v627 = vpop.f32.mrb[0].mxu0
  %v628 = vadd.f32 0.0, %v627
  %v629 = vpop.f32.mrb[0].mxu0
  %v630 = vpop.f32.mrb[0].mxu0
  %v631 = vadd.f32 0.0, %v630
  %v632 = vpop.f32.mrb[0].mxu0
  %633 = vmatprep.mubr.bf16.mxu0 0
  %634 = vmatmul.mubr.bf16.gmra.mrb[0].mxu0 %v349
  %v635 = vpop.f32.mrb[0].mxu0
  %v636 = vadd.f32 0.0, %v635
  %v637 = vpop.f32.mrb[0].mxu0
  %v638 = vpop.f32.mrb[0].mxu0
  %v639 = vadd.f32 0.0, %v638
  %v640 = vpop.f32.mrb[0].mxu0
  %641 = vmatprep.mubr.bf16.mxu0 0
  %642 = vmatmul.mubr.bf16.gmra.mrb[0].mxu0 %v352
  %v643 = vpop.f32.mrb[0].mxu0
  %v644 = vadd.f32 0.0, %v643
  %v645 = vpop.f32.mrb[0].mxu0
  %v646 = vpop.f32.mrb[0].mxu0
  %v647 = vadd.f32 0.0, %v646
  %v648 = vpop.f32.mrb[0].mxu0
  %649 = vdwg.mxu0
  %v650 = vld [vmem:[%s2] sm:$0x1]
  %v652 = vlaneseq
  %v653 = vshrl.u32 %v652, 7
  %v654 = vsub.s32 0, %v653
  %v655 = vrot.slane %v650, %v654
  %v657 = vmul.f32 %v396, %v655
  %v658 = vmul.f32 %v399, %v655
  %v659 = vmul.f32 %v404, %v655
  %v660 = vmul.f32 %v407, %v655
  %v661 = vmul.f32 %v412, %v655
  %v662 = vmul.f32 %v415, %v655
  %v663 = vmul.f32 %v420, %v655
  %v664 = vmul.f32 %v423, %v655
  %v665 = vmul.f32 %v428, %v655
  %v666 = vmul.f32 %v431, %v655
  %v667 = vmul.f32 %v436, %v655
  %v668 = vmul.f32 %v439, %v655
  %v669 = vmul.f32 %v444, %v655
  %v670 = vmul.f32 %v447, %v655
  %v671 = vmul.f32 %v452, %v655
  %v672 = vmul.f32 %v455, %v655
  %v673 = vmul.f32 %v460, %v655
  %v674 = vmul.f32 %v463, %v655
  %v675 = vmul.f32 %v468, %v655
  %v676 = vmul.f32 %v471, %v655
  %v677 = vmul.f32 %v476, %v655
  %v678 = vmul.f32 %v479, %v655
  %v679 = vmul.f32 %v484, %v655
  %v680 = vmul.f32 %v487, %v655
  %v681 = vmul.f32 %v492, %v655
  %v682 = vmul.f32 %v495, %v655
  %v683 = vmul.f32 %v500, %v655
  %v684 = vmul.f32 %v503, %v655
  %v685 = vmul.f32 %v508, %v655
  %v686 = vmul.f32 %v511, %v655
  %v687 = vmul.f32 %v516, %v655
  %v688 = vmul.f32 %v519, %v655
  %v689 = vmul.f32 %v524, %v655
  %v690 = vmul.f32 %v527, %v655
  %v691 = vmul.f32 %v532, %v655
  %v692 = vmul.f32 %v535, %v655
  %v693 = vmul.f32 %v540, %v655
  %v694 = vmul.f32 %v543, %v655
  %v695 = vmul.f32 %v548, %v655
  %v696 = vmul.f32 %v551, %v655
  %v697 = vmul.f32 %v556, %v655
  %v698 = vmul.f32 %v559, %v655
  %v699 = vmul.f32 %v564, %v655
  %v700 = vmul.f32 %v567, %v655
  %v701 = vmul.f32 %v572, %v655
  %v702 = vmul.f32 %v575, %v655
  %v703 = vmul.f32 %v580, %v655
  %v704 = vmul.f32 %v583, %v655
  %v705 = vmul.f32 %v588, %v655
  %v706 = vmul.f32 %v591, %v655
  %v707 = vmul.f32 %v596, %v655
  %v708 = vmul.f32 %v599, %v655
  %v709 = vmul.f32 %v604, %v655
  %v710 = vmul.f32 %v607, %v655
  %v711 = vmul.f32 %v612, %v655
  %v712 = vmul.f32 %v615, %v655
  %v713 = vmul.f32 %v620, %v655
  %v714 = vmul.f32 %v623, %v655
  %v715 = vmul.f32 %v628, %v655
  %v716 = vmul.f32 %v631, %v655
  %v717 = vmul.f32 %v636, %v655
  %v718 = vmul.f32 %v639, %v655
  %v719 = vmul.f32 %v644, %v655
  %v720 = vmul.f32 %v647, %v655
  %v721 = vld [vmem:[%s3] sm:$0x1]
  %v723 = vlaneseq
  %v724 = vshrl.u32 %v723, 7
  %v725 = vsub.s32 0, %v724
  %v726 = vrot.slane %v721, %v725
  %v728 = vadd.f32 %v657, %v726
  %v729 = vadd.f32 %v658, %v726
  %v730 = vadd.f32 %v659, %v726
  %v731 = vadd.f32 %v660, %v726
  %v732 = vadd.f32 %v661, %v726
  %v733 = vadd.f32 %v662, %v726
  %v734 = vadd.f32 %v663, %v726
  %v735 = vadd.f32 %v664, %v726
  %v736 = vadd.f32 %v665, %v726
  %v737 = vadd.f32 %v666, %v726
  %v738 = vadd.f32 %v667, %v726
  %v739 = vadd.f32 %v668, %v726
  %v740 = vadd.f32 %v669, %v726
  %v741 = vadd.f32 %v670, %v726
  %v742 = vadd.f32 %v671, %v726
  %v743 = vadd.f32 %v672, %v726
  %v744 = vadd.f32 %v673, %v726
  %v745 = vadd.f32 %v674, %v726
  %v746 = vadd.f32 %v675, %v726
  %v747 = vadd.f32 %v676, %v726
  %v748 = vadd.f32 %v677, %v726
  %v749 = vadd.f32 %v678, %v726
  %v750 = vadd.f32 %v679, %v726
  %v751 = vadd.f32 %v680, %v726
  %v752 = vadd.f32 %v681, %v726
  %v753 = vadd.f32 %v682, %v726
  %v754 = vadd.f32 %v683, %v726
  %v755 = vadd.f32 %v684, %v726
  %v756 = vadd.f32 %v685, %v726
  %v757 = vadd.f32 %v686, %v726
  %v758 = vadd.f32 %v687, %v726
  %v759 = vadd.f32 %v688, %v726
  %v760 = vadd.f32 %v689, %v726
  %v761 = vadd.f32 %v690, %v726
  %v762 = vadd.f32 %v691, %v726
  %v763 = vadd.f32 %v692, %v726
  %v764 = vadd.f32 %v693, %v726
  %v765 = vadd.f32 %v694, %v726
  %v766 = vadd.f32 %v695, %v726
  %v767 = vadd.f32 %v696, %v726
  %v768 = vadd.f32 %v697, %v726
  %v769 = vadd.f32 %v698, %v726
  %v770 = vadd.f32 %v699, %v726
  %v771 = vadd.f32 %v700, %v726
  %v772 = vadd.f32 %v701, %v726
  %v773 = vadd.f32 %v702, %v726
  %v774 = vadd.f32 %v703, %v726
  %v775 = vadd.f32 %v704, %v726
  %v776 = vadd.f32 %v705, %v726
  %v777 = vadd.f32 %v706, %v726
  %v778 = vadd.f32 %v707, %v726
  %v779 = vadd.f32 %v708, %v726
  %v780 = vadd.f32 %v709, %v726
  %v781 = vadd.f32 %v710, %v726
  %v782 = vadd.f32 %v711, %v726
  %v783 = vadd.f32 %v712, %v726
  %v784 = vadd.f32 %v713, %v726
  %v785 = vadd.f32 %v714, %v726
  %v786 = vadd.f32 %v715, %v726
  %v787 = vadd.f32 %v716, %v726
  %v788 = vadd.f32 %v717, %v726
  %v789 = vadd.f32 %v718, %v726
  %v790 = vadd.f32 %v719, %v726
  %v791 = vadd.f32 %v720, %v726
  %v792 = vmax.f32 %v728, 0.0
  %v793 = vmax.f32 %v729, 0.0
  %v794 = vmax.f32 %v730, 0.0
  %v795 = vmax.f32 %v731, 0.0
  %v796 = vmax.f32 %v732, 0.0
  %v797 = vmax.f32 %v733, 0.0
  %v798 = vmax.f32 %v734, 0.0
  %v799 = vmax.f32 %v735, 0.0
  %v800 = vmax.f32 %v736, 0.0
  %v801 = vmax.f32 %v737, 0.0
  %v802 = vmax.f32 %v738, 0.0
  %v803 = vmax.f32 %v739, 0.0
  %v804 = vmax.f32 %v740, 0.0
  %v805 = vmax.f32 %v741, 0.0
  %v806 = vmax.f32 %v742, 0.0
  %v807 = vmax.f32 %v743, 0.0
  %v808 = vmax.f32 %v744, 0.0
  %v809 = vmax.f32 %v745, 0.0
  %v810 = vmax.f32 %v746, 0.0
  %v811 = vmax.f32 %v747, 0.0
  %v812 = vmax.f32 %v748, 0.0
  %v813 = vmax.f32 %v749, 0.0
  %v814 = vmax.f32 %v750, 0.0
  %v815 = vmax.f32 %v751, 0.0
  %v816 = vmax.f32 %v752, 0.0
  %v817 = vmax.f32 %v753, 0.0
  %v818 = vmax.f32 %v754, 0.0
  %v819 = vmax.f32 %v755, 0.0
  %v820 = vmax.f32 %v756, 0.0
  %v821 = vmax.f32 %v757, 0.0
  %v822 = vmax.f32 %v758, 0.0
  %v823 = vmax.f32 %v759, 0.0
  %v824 = vmax.f32 %v760, 0.0
  %v825 = vmax.f32 %v761, 0.0
  %v826 = vmax.f32 %v762, 0.0
  %v827 = vmax.f32 %v763, 0.0
  %v828 = vmax.f32 %v764, 0.0
  %v829 = vmax.f32 %v765, 0.0
  %v830 = vmax.f32 %v766, 0.0
  %v831 = vmax.f32 %v767, 0.0
  %v832 = vmax.f32 %v768, 0.0
  %v833 = vmax.f32 %v769, 0.0
  %v834 = vmax.f32 %v770, 0.0
  %v835 = vmax.f32 %v771, 0.0
  %v836 = vmax.f32 %v772, 0.0
  %v837 = vmax.f32 %v773, 0.0
  %v838 = vmax.f32 %v774, 0.0
  %v839 = vmax.f32 %v775, 0.0
  %v840 = vmax.f32 %v776, 0.0
  %v841 = vmax.f32 %v777, 0.0
  %v842 = vmax.f32 %v778, 0.0
  %v843 = vmax.f32 %v779, 0.0
  %v844 = vmax.f32 %v780, 0.0
  %v845 = vmax.f32 %v781, 0.0
  %v846 = vmax.f32 %v782, 0.0
  %v847 = vmax.f32 %v783, 0.0
  %v848 = vmax.f32 %v784, 0.0
  %v849 = vmax.f32 %v785, 0.0
  %v850 = vmax.f32 %v786, 0.0
  %v851 = vmax.f32 %v787, 0.0
  %v852 = vmax.f32 %v788, 0.0
  %v853 = vmax.f32 %v789, 0.0
  %v854 = vmax.f32 %v790, 0.0
  %v855 = vmax.f32 %v791, 0.0
  %vm856 = vcmask 130048
  %857 = vst.msk [vmem:[%s4] sm:$0xff] %vm856, %v792
  %858 = vst.msk [vmem:[%s4 + $0x8] sm:$0xff] %vm856, %v793
  %859 = vst.msk [vmem:[%s4 + $0x10] sm:$0xff] %vm856, %v794
  %860 = vst.msk [vmem:[%s4 + $0x18] sm:$0xff] %vm856, %v795
  %861 = vst.msk [vmem:[%s4 + $0x20] sm:$0xff] %vm856, %v796
  %862 = vst.msk [vmem:[%s4 + $0x28] sm:$0xff] %vm856, %v797
  %863 = vst.msk [vmem:[%s4 + $0x30] sm:$0xff] %vm856, %v798
  %864 = vst.msk [vmem:[%s4 + $0x38] sm:$0xff] %vm856, %v799
  %865 = vst.msk [vmem:[%s4 + $0x40] sm:$0xff] %vm856, %v800
  %866 = vst.msk [vmem:[%s4 + $0x48] sm:$0xff] %vm856, %v801
  %867 = vst.msk [vmem:[%s4 + $0x50] sm:$0xff] %vm856, %v802
  %868 = vst.msk [vmem:[%s4 + $0x58] sm:$0xff] %vm856, %v803
  %869 = vst.msk [vmem:[%s4 + $0x60] sm:$0xff] %vm856, %v804
  %870 = vst.msk [vmem:[%s4 + $0x68] sm:$0xff] %vm856, %v805
  %871 = vst.msk [vmem:[%s4 + $0x70] sm:$0xff] %vm856, %v806
  %872 = vst.msk [vmem:[%s4 + $0x78] sm:$0xff] %vm856, %v807
  %873 = vst.msk [vmem:[%s4 + $0x80] sm:$0xff] %vm856, %v808
  %874 = vst.msk [vmem:[%s4 + $0x88] sm:$0xff] %vm856, %v809
  %875 = vst.msk [vmem:[%s4 + $0x90] sm:$0xff] %vm856, %v810
  %876 = vst.msk [vmem:[%s4 + $0x98] sm:$0xff] %vm856, %v811
  %877 = vst.msk [vmem:[%s4 + $0xa0] sm:$0xff] %vm856, %v812
  %878 = vst.msk [vmem:[%s4 + $0xa8] sm:$0xff] %vm856, %v813
  %879 = vst.msk [vmem:[%s4 + $0xb0] sm:$0xff] %vm856, %v814
  %880 = vst.msk [vmem:[%s4 + $0xb8] sm:$0xff] %vm856, %v815
  %881 = vst.msk [vmem:[%s4 + $0xc0] sm:$0xff] %vm856, %v816
  %882 = vst.msk [vmem:[%s4 + $0xc8] sm:$0xff] %vm856, %v817
  %883 = vst.msk [vmem:[%s4 + $0xd0] sm:$0xff] %vm856, %v818
  %884 = vst.msk [vmem:[%s4 + $0xd8] sm:$0xff] %vm856, %v819
  %885 = vst.msk [vmem:[%s4 + $0xe0] sm:$0xff] %vm856, %v820
  %886 = vst.msk [vmem:[%s4 + $0xe8] sm:$0xff] %vm856, %v821
  %887 = vst.msk [vmem:[%s4 + $0xf0] sm:$0xff] %vm856, %v822
  %888 = vst.msk [vmem:[%s4 + $0xf8] sm:$0xff] %vm856, %v823
  %889 = vst.msk [vmem:[%s4 + $0x100] sm:$0xff] %vm856, %v824
  %890 = vst.msk [vmem:[%s4 + $0x108] sm:$0xff] %vm856, %v825
  %891 = vst.msk [vmem:[%s4 + $0x110] sm:$0xff] %vm856, %v826
  %892 = vst.msk [vmem:[%s4 + $0x118] sm:$0xff] %vm856, %v827
  %893 = vst.msk [vmem:[%s4 + $0x120] sm:$0xff] %vm856, %v828
  %894 = vst.msk [vmem:[%s4 + $0x128] sm:$0xff] %vm856, %v829
  %895 = vst.msk [vmem:[%s4 + $0x130] sm:$0xff] %vm856, %v830
  %896 = vst.msk [vmem:[%s4 + $0x138] sm:$0xff] %vm856, %v831
  %897 = vst.msk [vmem:[%s4 + $0x140] sm:$0xff] %vm856, %v832
  %898 = vst.msk [vmem:[%s4 + $0x148] sm:$0xff] %vm856, %v833
  %899 = vst.msk [vmem:[%s4 + $0x150] sm:$0xff] %vm856, %v834
  %900 = vst.msk [vmem:[%s4 + $0x158] sm:$0xff] %vm856, %v835
  %901 = vst.msk [vmem:[%s4 + $0x160] sm:$0xff] %vm856, %v836
  %902 = vst.msk [vmem:[%s4 + $0x168] sm:$0xff] %vm856, %v837
  %903 = vst.msk [vmem:[%s4 + $0x170] sm:$0xff] %vm856, %v838
  %904 = vst.msk [vmem:[%s4 + $0x178] sm:$0xff] %vm856, %v839
  %905 = vst.msk [vmem:[%s4 + $0x180] sm:$0xff] %vm856, %v840
  %906 = vst.msk [vmem:[%s4 + $0x188] sm:$0xff] %vm856, %v841
  %907 = vst.msk [vmem:[%s4 + $0x190] sm:$0xff] %vm856, %v842
  %908 = vst.msk [vmem:[%s4 + $0x198] sm:$0xff] %vm856, %v843
  %909 = vst.msk [vmem:[%s4 + $0x1a0] sm:$0xff] %vm856, %v844
  %910 = vst.msk [vmem:[%s4 + $0x1a8] sm:$0xff] %vm856, %v845
  %911 = vst.msk [vmem:[%s4 + $0x1b0] sm:$0xff] %vm856, %v846
  %912 = vst.msk [vmem:[%s4 + $0x1b8] sm:$0xff] %vm856, %v847
  %913 = vst.msk [vmem:[%s4 + $0x1c0] sm:$0xff] %vm856, %v848
  %914 = vst.msk [vmem:[%s4 + $0x1c8] sm:$0xff] %vm856, %v849
  %915 = vst.msk [vmem:[%s4 + $0x1d0] sm:$0xff] %vm856, %v850
  %916 = vst.msk [vmem:[%s4 + $0x1d8] sm:$0xff] %vm856, %v851
  %917 = vst.msk [vmem:[%s4 + $0x1e0] sm:$0xff] %vm856, %v852
  %918 = vst.msk [vmem:[%s4 + $0x1e8] sm:$0xff] %vm856, %v853
  %919 = vst.msk [vmem:[%s4 + $0x1f0] sm:$0xff] %vm856, %v854
  %920 = vst.msk [vmem:[%s4 + $0x1f8] sm:$0xff] %vm856, %v855
  // Predicated region
  $region18: #{tpu_custom_call.1} parent=0 // pred_check
    _
  $region19: #{tpu_custom_call.1} parent=0 // pred_check_branch
    %922 = sbr.rel (0) target = $region21
  $region20: #{tpu_custom_call.1} parent=0 // pred_region
    _
  $region21: #{tpu_custom_call.1} parent=0 // pred_fallthru
    _
  // Predicated region
  $region22: #{tpu_custom_call.1} parent=0 // pred_check
    _
  $region23: #{tpu_custom_call.1} parent=0 // pred_check_branch
    %924 = sbr.rel (0) target = $region25
  $region24: #{tpu_custom_call.1} parent=0 // pred_region
    _
  $region25: #{tpu_custom_call.1} parent=0 // pred_fallthru
    _

</llo_original>
